<compile_context>
chip_gen: v7x
topology: tpu7x:2x2x1
jax: 0.10.0
libtpu: 0.0.40
codegen_flags: <defaults>
</compile_context>

<pallas_src>
import math
import functools

import jax
import jax.numpy as jnp
import numpy as np
from jax import lax
from jax.experimental import pallas as pl
from jax.experimental.pallas import tpu as pltpu

_BN_EPS = 1e-5
_LANE = 128


def _round_up(x, m):
    return ((x + m - 1) // m) * m


def _pad_dim(a, axis, target):
    pad = target - a.shape[axis]
    if pad <= 0:
        return a
    widths = [(0, 0)] * a.ndim
    widths[axis] = (0, pad)
    return jnp.pad(a, widths)


def _fold_bn(gamma, beta, mean, var):
    scale = gamma / jnp.sqrt(var + _BN_EPS)
    shift = beta - mean * scale
    return scale, shift


def _vmem_limit_bytes():
    """Generation-aware scoped-VMEM request (~3/4 of physical per core)."""
    try:
        info = pltpu.get_tpu_info()
        for name in ("vmem_capacity_bytes", "vmem_size_bytes"):
            cap = getattr(info, name, None)
            if cap:
                return int(cap) * 3 // 4
    except Exception:
        pass
    return 64 * 1024 * 1024


def _pick_row_tile(Ho, Wo):
    # Aim for a few thousand output pixels per grid step: enough to keep the
    # MXU busy and amortize per-step overhead, small enough that the per-step
    # temporaries (f32 acc, 9*C patch) stay well under the VMEM limit.
    th = max(1, min(Ho, 2048 // max(Wo, 1)))
    while Ho % th:
        th -= 1
    return th


# ----------------------------------------------------------------------------
# Fused BasicBlock kernel (one row tile of one batch element per grid step)
# ----------------------------------------------------------------------------
def _basic_block_kernel(x_ref, w1_ref, s1_ref, b1_ref, w2_ref, s2_ref, b2_ref,
                        *rest, stride, has_proj):
    """conv3x3(stride)+BN+ReLU -> conv3x3+BN -> +shortcut -> ReLU.

    x_ref   : (1, H+2(s+1), W+2, Cin)          bf16 when stride == 1
              (1, H+2(s+1), (W+2)//2, 2*Cin)   bf16 when stride == 2
              (column pairs packed into the lane dim by the wrapper)
    w1_ref  : (9*Cin, Cout)  bf16  (all nine taps stacked along K, kh-major)
    w2_ref  : (9*Cout, Cout) bf16
    s*/b*   : (1, Cout) f32 folded BN scale / shift
    ws_ref  : (Cin, Cout) bf16 (projection shortcut only), + ss/sb
    out_ref : (1, Th, Wo, Cout) bf16
    mid_ref : (Th+2, Wo+2, Cout) bf16 VMEM scratch (conv1 tile + conv2 halo)
    """
    if has_proj:
        ws_ref, ss_ref, sb_ref, out_ref, mid_ref = rest
    else:
        out_ref, mid_ref = rest

    s = stride
    _, Th, Wo, Cout = out_ref.shape
    Tm = Th + 2                                  # mid rows incl. conv2 halo
    r = pl.program_id(1)
    nr = pl.num_programs(1)

    # ---- gather this row tile's input slab (each row loaded exactly once) --
    if s == 1:
        Cin = x_ref.shape[-1]
        slab = x_ref[0, pl.ds(r * Th, Tm + 2), :, :]           # (Tm+2, W+2, Cin)
        rows_k = [slab[kh:kh + Tm] for kh in range(3)]         # conv1 kh taps
        parts1 = [rows_k[kh][:, kw:kw + Wo, :]
                  for kh in range(3) for kw in range(3)]
        sc_in = slab[2:2 + Th, 1:1 + Wo, :]                    # shortcut input
    else:   # stride 2: columns pair-packed into the lane dim by the wrapper
        Cin = x_ref.shape[-1] // 2
        slab = x_ref[0, pl.ds(2 * r * Th, 2 * Tm + 2), :, :]   # (2Tm+2, Wpp, 2Cin)
        slab = slab.reshape(Tm + 1, 2, slab.shape[1], slab.shape[2])
        ev, od = slab[:, 0], slab[:, 1]                        # even / odd rows
        rows_k = [ev[0:Tm], od[0:Tm], ev[1:Tm + 1]]
        parts1 = []
        for kh in range(3):
            rk = rows_k[kh]
            parts1.append(rk[:, 0:Wo, :])                      # kw=0,1 (packed)
            parts1.append(rk[:, 1:Wo + 1, 0:Cin])              # kw=2
        sc_in = od[1:1 + Th, 0:Wo, Cin:2 * Cin]                # x[2o, 2wo]

    # ---- conv1 + bn1 + relu -> VMEM mid scratch (one deep-K dot) ----
    patch1 = jnp.concatenate(parts1, axis=-1).reshape(Tm * Wo, 9 * Cin)
    y1 = jnp.dot(patch1, w1_ref[...], preferred_element_type=jnp.float32)
    y1 = jnp.maximum(y1 * s1_ref[...] + b1_ref[...], 0.0)
    y1 = y1.reshape(Tm, Wo, Cout).astype(mid_ref.dtype)
    zcol = jnp.zeros((Tm, 1, Cout), mid_ref.dtype)
    # Zero column halo folded into one full-width, unmasked store.
    mid_ref[...] = jnp.concatenate([zcol, y1, zcol], axis=1)

    # conv2's zero row padding at the image top / bottom (boundary tiles only).
    @pl.when(r == 0)
    def _():
        mid_ref[0:1] = jnp.zeros((1,) + mid_ref.shape[1:], mid_ref.dtype)

    @pl.when(r == nr - 1)
    def _():
        mid_ref[Tm - 1:Tm] = jnp.zeros((1,) + mid_ref.shape[1:], mid_ref.dtype)

    # ---- conv2 + bn2 (one deep-K dot) ----
    parts2 = []
    for kh in range(3):
        rk = mid_ref[kh:kh + Th, :, :]                         # (Th, Wo+2, Cout)
        for kw in range(3):
            parts2.append(rk[:, kw:kw + Wo, :])
    patch2 = jnp.concatenate(parts2, axis=-1).reshape(Th * Wo, 9 * Cout)
    y2 = jnp.dot(patch2, w2_ref[...], preferred_element_type=jnp.float32)
    y2 = y2 * s2_ref[...] + b2_ref[...]

    # ---- shortcut ----
    if has_proj:
        sc = jnp.dot(sc_in.reshape(Th * Wo, Cin), ws_ref[...],
                     preferred_element_type=jnp.float32)
        sc = sc * ss_ref[...] + sb_ref[...]
    else:
        sc = sc_in.reshape(Th * Wo, Cout).astype(jnp.float32)

    out = jnp.maximum(y2 + sc, 0.0)
    out_ref[...] = out.reshape(1, Th, Wo, Cout).astype(out_ref.dtype)


# ----------------------------------------------------------------------------
# pallas_call wrapper (grid over batch x output-row tiles)
# ----------------------------------------------------------------------------
def _basic_block_forward(xp, w1r, s1, b1, w2r, s2, b2, proj, *,
                         stride, Ho, Wo, row_tile):
    N = xp.shape[0]
    Cout = w1r.shape[-1]
    Th = row_tile
    assert Ho % Th == 0
    R = Ho // Th

    # Full halo'd input per batch element: the block index is constant across
    # the row axis, so it is DMA'd once per image and reused by all row tiles.
    x_spec = pl.BlockSpec((1,) + xp.shape[1:], lambda n, r: (n, 0, 0, 0))

    def bcast(a):
        return pl.BlockSpec(a.shape, lambda n, r: (0,) * a.ndim)

    args = [xp, w1r, s1, b1, w2r, s2, b2]
    in_specs = [x_spec] + [bcast(a) for a in args[1:]]
    if proj is not None:
        args += list(proj)
        in_specs += [bcast(a) for a in proj]

    kernel = functools.partial(_basic_block_kernel, stride=stride,
                               has_proj=proj is not None)

    return pl.pallas_call(
        kernel,
        out_shape=jax.ShapeDtypeStruct((N, Ho, Wo, Cout), jnp.bfloat16),
        grid=(N, R),
        in_specs=in_specs,
        out_specs=pl.BlockSpec((1, Th, Wo, Cout), lambda n, r: (n, r, 0, 0)),
        scratch_shapes=[pltpu.VMEM((Th + 2, Wo + 2, Cout), jnp.bfloat16)],
        compiler_params=pltpu.CompilerParams(
            dimension_semantics=("parallel", "parallel"),
            vmem_limit_bytes=_vmem_limit_bytes()),
    )(*args)


# ----------------------------------------------------------------------------
# BasicBlock module (parameters + forward)
# ----------------------------------------------------------------------------
class BasicBlockPallas:
    expansion = 1

    def __init__(self, in_planes, planes, stride=1, key=None, row_tile=None):
        assert stride in (1, 2)
        if key is None:
            key = jax.random.PRNGKey(0)
        self.in_planes = in_planes
        self.planes = planes
        self.stride = stride
        self.row_tile = row_tile
        self.has_proj = (stride != 1) or (in_planes != self.expansion * planes)

        ks = jax.random.split(key, 6)

        def bn_params(k, c):
            k0, k1, k2, k3 = jax.random.split(k, 4)
            gamma = 1.0 + 0.1 * jax.random.normal(k0, (c,), jnp.float32)
            beta = 0.1 * jax.random.normal(k1, (c,), jnp.float32)
            mean = 0.1 * jax.random.normal(k2, (c,), jnp.float32)
            var = 1.0 + 0.1 * jnp.abs(jax.random.normal(k3, (c,), jnp.float32))
            return _fold_bn(gamma, beta, mean, var)

        # f32 master params (HWIO) — used by the reference and to build the
        # packed bf16 kernel params.
        self.w1 = jax.random.normal(ks[0], (3, 3, in_planes, planes),
                                    jnp.float32) / math.sqrt(9 * in_planes)
        self.scale1, self.shift1 = bn_params(ks[1], planes)
        self.w2 = jax.random.normal(ks[2], (3, 3, planes, planes),
                                    jnp.float32) / math.sqrt(9 * planes)
        self.scale2, self.shift2 = bn_params(ks[3], planes)
        if self.has_proj:
            self.ws = jax.random.normal(ks[4], (in_planes, planes),
                                        jnp.float32) / math.sqrt(in_planes)
            self.scale_s, self.shift_s = bn_params(ks[5], planes)

        # ---- pack / pad for the fused kernel (lane-dense channels, bf16) ----
        # TODO(synk): for the 64-channel ResNet stage, pack spatial pairs into
        # the lane dim instead of zero-padding Cin 64->128 (2x wasted K / DMA).
        self.cin_p = _round_up(in_planes, _LANE)
        self.cout_p = _round_up(planes, _LANE)

        w1p = _pad_dim(_pad_dim(self.w1, 2, self.cin_p), 3, self.cout_p)
        self._w1k = w1p.reshape(9 * self.cin_p, self.cout_p).astype(jnp.bfloat16)
        w2p = _pad_dim(_pad_dim(self.w2, 2, self.cout_p), 3, self.cout_p)
        self._w2k = w2p.reshape(9 * self.cout_p, self.cout_p).astype(jnp.bfloat16)

        def pad_ss(sc, sh):
            return (_pad_dim(sc.reshape(1, -1), 1, self.cout_p),
                    _pad_dim(sh.reshape(1, -1), 1, self.cout_p))

        self._s1k, self._b1k = pad_ss(self.scale1, self.shift1)
        self._s2k, self._b2k = pad_ss(self.scale2, self.shift2)
        if self.has_proj:
            wsp = _pad_dim(_pad_dim(self.ws, 0, self.cin_p), 1, self.cout_p)
            ssk, sbk = pad_ss(self.scale_s, self.shift_s)
            self._proj = (wsp.astype(jnp.bfloat16), ssk, sbk)
        else:
            self._proj = None

    def __call__(self, x_nchw):
        # TODO(synk): in a full network, keep activations NHWC / channel-padded
        # bf16 between blocks so these transpose / pad / slice HBM passes only
        # happen once at the network boundary.
        x = jnp.transpose(x_nchw, (0, 2, 3, 1))                  # NCHW -> NHWC
        N, H, W, Cin = x.shape
        s = self.stride
        assert Cin == self.in_planes
        assert H % s == 0 and W % s == 0
        Ho, Wo = H // s, W // s

        x = _pad_dim(x.astype(jnp.bfloat16), 3, self.cin_p)      # lane-dense C
        # (s+1) zero rows top/bottom: conv1 halo + the rows a row tile
        # over-reads when recomputing its one-row conv1 halo.
        xp = jnp.pad(x, ((0, 0), (s + 1, s + 1), (1, 1), (0, 0)))
        if s == 2:
            # Pack horizontal column pairs into the lane dim (free row-major
            # regroup) so the kernel computes stride-2 outputs with
            # unit-stride slices only.
            xp = xp.reshape(N, H + 2 * (s + 1), (W + 2) // 2, 2 * self.cin_p)

        Th = self.row_tile if self.row_tile else _pick_row_tile(Ho, Wo)
        Th = max(1, min(Th, Ho))
        while Ho % Th:
            Th -= 1

        out = _basic_block_forward(xp, self._w1k, self._s1k, self._b1k,
                                   self._w2k, self._s2k, self._b2k,
                                   self._proj, stride=s, Ho=Ho, Wo=Wo,
                                   row_tile=Th)
        out = out[..., :self.planes]
        return jnp.transpose(out, (0, 3, 1, 2))                  # NHWC -> NCHW


# ----------------------------------------------------------------------------
# Pure-JAX reference (mirrors the kernel's bf16 rounding points)
# ----------------------------------------------------------------------------
def _ref_forward(block, x_nchw):
    f32 = jnp.float32
    x = jnp.transpose(x_nchw, (0, 2, 3, 1)).astype(jnp.bfloat16).astype(f32)

    def conv(v, w, stride, pad):
        return lax.conv_general_dilated(
            v, w.astype(jnp.bfloat16).astype(f32), (stride, stride),
            ((pad, pad), (pad, pad)),
            dimension_numbers=("NHWC", "HWIO", "NHWC"),
            precision=lax.Precision.HIGHEST)

    def bn(v, scale, shift):
        return v * scale.reshape(1, 1, 1, -1) + shift.reshape(1, 1, 1, -1)

    out = jax.nn.relu(bn(conv(x, block.w1, block.stride, 1),
                         block.scale1, block.shift1))
    out = out.astype(jnp.bfloat16).astype(f32)     # kernel stores mid in bf16
    out = bn(conv(out, block.w2, 1, 1), block.scale2, block.shift2)
    if block.has_proj:
        sc = bn(conv(x, block.ws[None, None], block.stride, 0),
                block.scale_s, block.shift_s)
    else:
        sc = x
    out = jax.nn.relu(out + sc)
    out = out.astype(jnp.bfloat16).astype(f32)     # kernel emits bf16 output
    return jnp.transpose(out, (0, 3, 1, 2))


# ----------------------------------------------------------------------------
if __name__ == "__main__":
    key = jax.random.PRNGKey(0)
    kx, kb1, kb2 = jax.random.split(key, 3)

    x = jax.random.normal(kx, (2, 4, 16, 16), jnp.float32)

    # Case 1: projection shortcut (stride=2, channel change): (2,4,16,16)->(2,8,8,8).
    # row_tile=4 -> 2 row tiles per image (exercises halo recompute + boundaries).
    block1 = BasicBlockPallas(4, 8, stride=2, key=kb1, row_tile=4)
    y1 = jax.block_until_ready(block1(x))
    r1 = _ref_forward(block1, x)
    assert y1.shape == (2, 8, 8, 8)
    np.testing.assert_allclose(np.asarray(y1.astype(jnp.float32)),
                               np.asarray(r1), atol=2e-2, rtol=2e-2)

    # Case 2: identity shortcut (stride=1, same channels): (2,4,16,16)->(2,4,16,16).
    # row_tile=4 -> 4 row tiles per image.
    block2 = BasicBlockPallas(4, 4, stride=1, key=kb2, row_tile=4)
    y2 = jax.block_until_ready(block2(x))
    r2 = _ref_forward(block2, x)
    assert y2.shape == (2, 4, 16, 16)
    np.testing.assert_allclose(np.asarray(y2.astype(jnp.float32)),
                               np.asarray(r2), atol=2e-2, rtol=2e-2)

    print("KERNEL_OK")
</pallas_src>

<mosaic_0001>
module attributes {stable_mosaic.version = 11 : i64} {
  func.func @_basic_block_kernel(%arg0: i32, %arg1: i32, %arg2: memref<1x22x9x256xbf16, #tpu.memory_space<vmem>>, %arg3: memref<1152x128xbf16, #tpu.memory_space<vmem>>, %arg4: memref<1x128xf32, #tpu.memory_space<vmem>>, %arg5: memref<1x128xf32, #tpu.memory_space<vmem>>, %arg6: memref<1152x128xbf16, #tpu.memory_space<vmem>>, %arg7: memref<1x128xf32, #tpu.memory_space<vmem>>, %arg8: memref<1x128xf32, #tpu.memory_space<vmem>>, %arg9: memref<128x128xbf16, #tpu.memory_space<vmem>>, %arg10: memref<1x128xf32, #tpu.memory_space<vmem>>, %arg11: memref<1x128xf32, #tpu.memory_space<vmem>>, %arg12: memref<1x4x8x128xbf16, #tpu.memory_space<vmem>>, %arg13: memref<6x10x128xbf16, #tpu.memory_space<vmem>>) attributes {dimension_semantics = [#tpu.dimension_semantics<parallel>, #tpu.dimension_semantics<parallel>], iteration_bounds = array<i64: 2, 2>, scalar_prefetch = 0 : i64, scratch_operands = 1 : i64, tpu.core_type = #tpu.core_type<tc>, window_params = [{transform_indices = @transform_0, window_bounds = array<i64: 1, 22, 9, 256>}, {pipeline_mode = #tpu.pipeline_mode<synchronous>, transform_indices = @transform_1, window_bounds = array<i64: 1152, 128>}, {pipeline_mode = #tpu.pipeline_mode<synchronous>, transform_indices = @transform_2, window_bounds = array<i64: 1, 128>}, {pipeline_mode = #tpu.pipeline_mode<synchronous>, transform_indices = @transform_3, window_bounds = array<i64: 1, 128>}, {pipeline_mode = #tpu.pipeline_mode<synchronous>, transform_indices = @transform_4, window_bounds = array<i64: 1152, 128>}, {pipeline_mode = #tpu.pipeline_mode<synchronous>, transform_indices = @transform_5, window_bounds = array<i64: 1, 128>}, {pipeline_mode = #tpu.pipeline_mode<synchronous>, transform_indices = @transform_6, window_bounds = array<i64: 1, 128>}, {pipeline_mode = #tpu.pipeline_mode<synchronous>, transform_indices = @transform_7, window_bounds = array<i64: 128, 128>}, {pipeline_mode = #tpu.pipeline_mode<synchronous>, transform_indices = @transform_8, window_bounds = array<i64: 1, 128>}, {pipeline_mode = #tpu.pipeline_mode<synchronous>, transform_indices = @transform_9, window_bounds = array<i64: 1, 128>}, {transform_indices = @transform_10, window_bounds = array<i64: 1, 4, 8, 128>}]} {
    %c2_i32 = arith.constant 2 : i32
    %0 = arith.muli %c2_i32, %arg1 : i32
    %c4_i32 = arith.constant 4 : i32
    %1 = arith.muli %0, %c4_i32 : i32
    %c0 = arith.constant 0 : index
    %2 = arith.index_cast %1 : i32 to index
    %c0_0 = arith.constant 0 : index
    %c0_1 = arith.constant 0 : index
    %3 = vector.load %arg2[%c0, %2, %c0_0, %c0_1] : memref<1x22x9x256xbf16, #tpu.memory_space<vmem>>, vector<1x14x9x256xbf16>
    %4 = vector.shape_cast %3 : vector<1x14x9x256xbf16> to vector<14x9x256xbf16>
    %5 = vector.shape_cast %4 : vector<14x9x256xbf16> to vector<7x2x9x256xbf16>
    %6 = vector.extract_strided_slice %5 {offsets = [0, 0, 0, 0], sizes = [7, 1, 9, 256], strides = [1, 1, 1, 1]} : vector<7x2x9x256xbf16> to vector<7x1x9x256xbf16>
    %7 = vector.shape_cast %6 : vector<7x1x9x256xbf16> to vector<7x9x256xbf16>
    %8 = vector.extract_strided_slice %5 {offsets = [0, 1, 0, 0], sizes = [7, 1, 9, 256], strides = [1, 1, 1, 1]} : vector<7x2x9x256xbf16> to vector<7x1x9x256xbf16>
    %9 = vector.shape_cast %8 : vector<7x1x9x256xbf16> to vector<7x9x256xbf16>
    %10 = vector.extract_strided_slice %7 {offsets = [0, 0, 0], sizes = [6, 9, 256], strides = [1, 1, 1]} : vector<7x9x256xbf16> to vector<6x9x256xbf16>
    %11 = vector.extract_strided_slice %9 {offsets = [0, 0, 0], sizes = [6, 9, 256], strides = [1, 1, 1]} : vector<7x9x256xbf16> to vector<6x9x256xbf16>
    %12 = vector.extract_strided_slice %7 {offsets = [1, 0, 0], sizes = [6, 9, 256], strides = [1, 1, 1]} : vector<7x9x256xbf16> to vector<6x9x256xbf16>
    %13 = vector.extract_strided_slice %10 {offsets = [0, 0, 0], sizes = [6, 8, 256], strides = [1, 1, 1]} : vector<6x9x256xbf16> to vector<6x8x256xbf16>
    %14 = vector.extract_strided_slice %10 {offsets = [0, 1, 0], sizes = [6, 8, 128], strides = [1, 1, 1]} : vector<6x9x256xbf16> to vector<6x8x128xbf16>
    %15 = vector.extract_strided_slice %11 {offsets = [0, 0, 0], sizes = [6, 8, 256], strides = [1, 1, 1]} : vector<6x9x256xbf16> to vector<6x8x256xbf16>
    %16 = vector.extract_strided_slice %11 {offsets = [0, 1, 0], sizes = [6, 8, 128], strides = [1, 1, 1]} : vector<6x9x256xbf16> to vector<6x8x128xbf16>
    %17 = vector.extract_strided_slice %12 {offsets = [0, 0, 0], sizes = [6, 8, 256], strides = [1, 1, 1]} : vector<6x9x256xbf16> to vector<6x8x256xbf16>
    %18 = vector.extract_strided_slice %12 {offsets = [0, 1, 0], sizes = [6, 8, 128], strides = [1, 1, 1]} : vector<6x9x256xbf16> to vector<6x8x128xbf16>
    %19 = vector.extract_strided_slice %9 {offsets = [1, 0, 128], sizes = [4, 8, 128], strides = [1, 1, 1]} : vector<7x9x256xbf16> to vector<4x8x128xbf16>
    %20 = tpu.concatenate %13, %14, %15, %16, %17, %18 in 2 : vector<6x8x256xbf16>, vector<6x8x128xbf16>, vector<6x8x256xbf16>, vector<6x8x128xbf16>, vector<6x8x256xbf16>, vector<6x8x128xbf16> -> vector<6x8x1152xbf16>
    %21 = vector.shape_cast %20 : vector<6x8x1152xbf16> to vector<48x1152xbf16>
    %c0_2 = arith.constant 0 : index
    %c0_3 = arith.constant 0 : index
    %22 = vector.load %arg3[%c0_2, %c0_3] : memref<1152x128xbf16, #tpu.memory_space<vmem>>, vector<1152x128xbf16>
    %cst = arith.constant dense<0.000000e+00> : vector<48x128xf32>
    %23 = tpu.matmul %21, %22, %cst {dimension_numbers = #tpu.dot_dimension_numbers<[1], [0], [0], [1], [0, 0, 1, 1], [], []>} : vector<48x1152xbf16>, vector<1152x128xbf16>, vector<48x128xf32> -> vector<48x128xf32>
    %c0_4 = arith.constant 0 : index
    %c0_5 = arith.constant 0 : index
    %24 = vector.load %arg4[%c0_4, %c0_5] : memref<1x128xf32, #tpu.memory_space<vmem>>, vector<1x128xf32>
    %25 = vector.broadcast %24 : vector<1x128xf32> to vector<48x128xf32>
    %26 = arith.mulf %23, %25 : vector<48x128xf32>
    %c0_6 = arith.constant 0 : index
    %c0_7 = arith.constant 0 : index
    %27 = vector.load %arg5[%c0_6, %c0_7] : memref<1x128xf32, #tpu.memory_space<vmem>>, vector<1x128xf32>
    %28 = vector.broadcast %27 : vector<1x128xf32> to vector<48x128xf32>
    %29 = arith.addf %26, %28 : vector<48x128xf32>
    %cst_8 = arith.constant 0.000000e+00 : f32
    %30 = vector.broadcast %cst_8 : f32 to vector<48x128xf32>
    %31 = arith.maximumf %29, %30 : vector<48x128xf32>
    %32 = vector.shape_cast %31 : vector<48x128xf32> to vector<6x8x128xf32>
    %33 = arith.truncf %32 : vector<6x8x128xf32> to vector<6x8x128xbf16>
    %cst_9 = arith.constant 0.000000e+00 : bf16
    %34 = vector.broadcast %cst_9 : bf16 to vector<6x1x128xbf16>
    %35 = tpu.concatenate %34, %33, %34 in 1 : vector<6x1x128xbf16>, vector<6x8x128xbf16>, vector<6x1x128xbf16> -> vector<6x10x128xbf16>
    %c0_10 = arith.constant 0 : index
    %c0_11 = arith.constant 0 : index
    %c0_12 = arith.constant 0 : index
    %36 = vector.load %arg13[%c0_10, %c0_11, %c0_12] : memref<6x10x128xbf16, #tpu.memory_space<vmem>>, vector<6x10x128xbf16>
    tpu.vector_store %arg13[%c0_10, %c0_11, %c0_12], %35 {strides = array<i32>} : memref<6x10x128xbf16, #tpu.memory_space<vmem>>, vector<6x10x128xbf16>,
    %c0_i32 = arith.constant 0 : i32
    %37 = arith.cmpi eq, %arg1, %c0_i32 : i32
    %38 = arith.extui %37 : i1 to i32
    %c0_i32_13 = arith.constant 0 : i32
    %39 = arith.cmpi ne, %38, %c0_i32_13 : i32
    scf.if %39 {
      %cst_41 = arith.constant 0.000000e+00 : bf16
      %80 = vector.broadcast %cst_41 : bf16 to vector<1x10x128xbf16>
      %c0_42 = arith.constant 0 : index
      %c0_43 = arith.constant 0 : index
      %c0_44 = arith.constant 0 : index
      %81 = vector.load %arg13[%c0_42, %c0_43, %c0_44] : memref<6x10x128xbf16, #tpu.memory_space<vmem>>, vector<1x10x128xbf16>
      tpu.vector_store %arg13[%c0_42, %c0_43, %c0_44], %80 {strides = array<i32>} : memref<6x10x128xbf16, #tpu.memory_space<vmem>>, vector<1x10x128xbf16>,
    } else {
    }
    %c1_i32 = arith.constant 1 : i32
    %40 = arith.cmpi eq, %arg1, %c1_i32 : i32
    %41 = arith.extui %40 : i1 to i32
    %c0_i32_14 = arith.constant 0 : i32
    %42 = arith.cmpi ne, %41, %c0_i32_14 : i32
    scf.if %42 {
      %cst_41 = arith.constant 0.000000e+00 : bf16
      %80 = vector.broadcast %cst_41 : bf16 to vector<1x10x128xbf16>
      %c5 = arith.constant 5 : index
      %c0_42 = arith.constant 0 : index
      %c0_43 = arith.constant 0 : index
      %81 = vector.load %arg13[%c5, %c0_42, %c0_43] : memref<6x10x128xbf16, #tpu.memory_space<vmem>>, vector<1x10x128xbf16>
      tpu.vector_store %arg13[%c5, %c0_42, %c0_43], %80 {strides = array<i32>} : memref<6x10x128xbf16, #tpu.memory_space<vmem>>, vector<1x10x128xbf16>,
    } else {
    }
    %c0_15 = arith.constant 0 : index
    %c0_16 = arith.constant 0 : index
    %c0_17 = arith.constant 0 : index
    %43 = vector.load %arg13[%c0_15, %c0_16, %c0_17] : memref<6x10x128xbf16, #tpu.memory_space<vmem>>, vector<4x10x128xbf16>
    %44 = vector.extract_strided_slice %43 {offsets = [0, 0, 0], sizes = [4, 8, 128], strides = [1, 1, 1]} : vector<4x10x128xbf16> to vector<4x8x128xbf16>
    %45 = vector.extract_strided_slice %43 {offsets = [0, 1, 0], sizes = [4, 8, 128], strides = [1, 1, 1]} : vector<4x10x128xbf16> to vector<4x8x128xbf16>
    %46 = vector.extract_strided_slice %43 {offsets = [0, 2, 0], sizes = [4, 8, 128], strides = [1, 1, 1]} : vector<4x10x128xbf16> to vector<4x8x128xbf16>
    %c1 = arith.constant 1 : index
    %c0_18 = arith.constant 0 : index
    %c0_19 = arith.constant 0 : index
    %47 = vector.load %arg13[%c1, %c0_18, %c0_19] : memref<6x10x128xbf16, #tpu.memory_space<vmem>>, vector<4x10x128xbf16>
    %48 = vector.extract_strided_slice %47 {offsets = [0, 0, 0], sizes = [4, 8, 128], strides = [1, 1, 1]} : vector<4x10x128xbf16> to vector<4x8x128xbf16>
    %49 = vector.extract_strided_slice %47 {offsets = [0, 1, 0], sizes = [4, 8, 128], strides = [1, 1, 1]} : vector<4x10x128xbf16> to vector<4x8x128xbf16>
    %50 = vector.extract_strided_slice %47 {offsets = [0, 2, 0], sizes = [4, 8, 128], strides = [1, 1, 1]} : vector<4x10x128xbf16> to vector<4x8x128xbf16>
    %c2 = arith.constant 2 : index
    %c0_20 = arith.constant 0 : index
    %c0_21 = arith.constant 0 : index
    %51 = vector.load %arg13[%c2, %c0_20, %c0_21] : memref<6x10x128xbf16, #tpu.memory_space<vmem>>, vector<4x10x128xbf16>
    %52 = vector.extract_strided_slice %51 {offsets = [0, 0, 0], sizes = [4, 8, 128], strides = [1, 1, 1]} : vector<4x10x128xbf16> to vector<4x8x128xbf16>
    %53 = vector.extract_strided_slice %51 {offsets = [0, 1, 0], sizes = [4, 8, 128], strides = [1, 1, 1]} : vector<4x10x128xbf16> to vector<4x8x128xbf16>
    %54 = vector.extract_strided_slice %51 {offsets = [0, 2, 0], sizes = [4, 8, 128], strides = [1, 1, 1]} : vector<4x10x128xbf16> to vector<4x8x128xbf16>
    %55 = tpu.concatenate %44, %45, %46, %48, %49, %50, %52, %53, %54 in 2 : vector<4x8x128xbf16>, vector<4x8x128xbf16>, vector<4x8x128xbf16>, vector<4x8x128xbf16>, vector<4x8x128xbf16>, vector<4x8x128xbf16>, vector<4x8x128xbf16>, vector<4x8x128xbf16>, vector<4x8x128xbf16> -> vector<4x8x1152xbf16>
    %56 = vector.shape_cast %55 : vector<4x8x1152xbf16> to vector<32x1152xbf16>
    %c0_22 = arith.constant 0 : index
    %c0_23 = arith.constant 0 : index
    %57 = vector.load %arg6[%c0_22, %c0_23] : memref<1152x128xbf16, #tpu.memory_space<vmem>>, vector<1152x128xbf16>
    %cst_24 = arith.constant dense<0.000000e+00> : vector<32x128xf32>
    %58 = tpu.matmul %56, %57, %cst_24 {dimension_numbers = #tpu.dot_dimension_numbers<[1], [0], [0], [1], [0, 0, 1, 1], [], []>} : vector<32x1152xbf16>, vector<1152x128xbf16>, vector<32x128xf32> -> vector<32x128xf32>
    %c0_25 = arith.constant 0 : index
    %c0_26 = arith.constant 0 : index
    %59 = vector.load %arg7[%c0_25, %c0_26] : memref<1x128xf32, #tpu.memory_space<vmem>>, vector<1x128xf32>
    %60 = vector.broadcast %59 : vector<1x128xf32> to vector<32x128xf32>
    %61 = arith.mulf %58, %60 : vector<32x128xf32>
    %c0_27 = arith.constant 0 : index
    %c0_28 = arith.constant 0 : index
    %62 = vector.load %arg8[%c0_27, %c0_28] : memref<1x128xf32, #tpu.memory_space<vmem>>, vector<1x128xf32>
    %63 = vector.broadcast %62 : vector<1x128xf32> to vector<32x128xf32>
    %64 = arith.addf %61, %63 : vector<32x128xf32>
    %65 = vector.shape_cast %19 : vector<4x8x128xbf16> to vector<32x128xbf16>
    %c0_29 = arith.constant 0 : index
    %c0_30 = arith.constant 0 : index
    %66 = vector.load %arg9[%c0_29, %c0_30] : memref<128x128xbf16, #tpu.memory_space<vmem>>, vector<128x128xbf16>
    %cst_31 = arith.constant dense<0.000000e+00> : vector<32x128xf32>
    %67 = tpu.matmul %65, %66, %cst_31 {dimension_numbers = #tpu.dot_dimension_numbers<[1], [0], [0], [1], [0, 0, 1, 1], [], []>} : vector<32x128xbf16>, vector<128x128xbf16>, vector<32x128xf32> -> vector<32x128xf32>
    %c0_32 = arith.constant 0 : index
    %c0_33 = arith.constant 0 : index
    %68 = vector.load %arg10[%c0_32, %c0_33] : memref<1x128xf32, #tpu.memory_space<vmem>>, vector<1x128xf32>
    %69 = vector.broadcast %68 : vector<1x128xf32> to vector<32x128xf32>
    %70 = arith.mulf %67, %69 : vector<32x128xf32>
    %c0_34 = arith.constant 0 : index
    %c0_35 = arith.constant 0 : index
    %71 = vector.load %arg11[%c0_34, %c0_35] : memref<1x128xf32, #tpu.memory_space<vmem>>, vector<1x128xf32>
    %72 = vector.broadcast %71 : vector<1x128xf32> to vector<32x128xf32>
    %73 = arith.addf %70, %72 : vector<32x128xf32>
    %74 = arith.addf %64, %73 : vector<32x128xf32>
    %cst_36 = arith.constant 0.000000e+00 : f32
    %75 = vector.broadcast %cst_36 : f32 to vector<32x128xf32>
    %76 = arith.maximumf %74, %75 : vector<32x128xf32>
    %77 = vector.shape_cast %76 : vector<32x128xf32> to vector<1x4x8x128xf32>
    %78 = arith.truncf %77 : vector<1x4x8x128xf32> to vector<1x4x8x128xbf16>
    %c0_37 = arith.constant 0 : index
    %c0_38 = arith.constant 0 : index
    %c0_39 = arith.constant 0 : index
    %c0_40 = arith.constant 0 : index
    %79 = vector.load %arg12[%c0_37, %c0_38, %c0_39, %c0_40] : memref<1x4x8x128xbf16, #tpu.memory_space<vmem>>, vector<1x4x8x128xbf16>
    tpu.vector_store %arg12[%c0_37, %c0_38, %c0_39, %c0_40], %78 {strides = array<i32>} : memref<1x4x8x128xbf16, #tpu.memory_space<vmem>>, vector<1x4x8x128xbf16>,
    return
  }
  func.func @transform_0(%arg0: i32, %arg1: i32) -> (i32, i32, i32, i32) {
    %c0_i32 = arith.constant 0 : i32
    %c0_i32_0 = arith.constant 0 : i32
    %c0_i32_1 = arith.constant 0 : i32
    %c0_i32_2 = arith.constant 0 : i32
    return %arg0, %c0_i32, %c0_i32_0, %c0_i32_1 : i32, i32, i32, i32
  }
  func.func @transform_1(%arg0: i32, %arg1: i32) -> (i32, i32) {
    %c0_i32 = arith.constant 0 : i32
    %c0_i32_0 = arith.constant 0 : i32
    %c0_i32_1 = arith.constant 0 : i32
    return %c0_i32, %c0_i32_0 : i32, i32
  }
  func.func @transform_2(%arg0: i32, %arg1: i32) -> (i32, i32) {
    %c0_i32 = arith.constant 0 : i32
    %c0_i32_0 = arith.constant 0 : i32
    %c0_i32_1 = arith.constant 0 : i32
    return %c0_i32, %c0_i32_0 : i32, i32
  }
  func.func @transform_3(%arg0: i32, %arg1: i32) -> (i32, i32) {
    %c0_i32 = arith.constant 0 : i32
    %c0_i32_0 = arith.constant 0 : i32
    %c0_i32_1 = arith.constant 0 : i32
    return %c0_i32, %c0_i32_0 : i32, i32
  }
  func.func @transform_4(%arg0: i32, %arg1: i32) -> (i32, i32) {
    %c0_i32 = arith.constant 0 : i32
    %c0_i32_0 = arith.constant 0 : i32
    %c0_i32_1 = arith.constant 0 : i32
    return %c0_i32, %c0_i32_0 : i32, i32
  }
  func.func @transform_5(%arg0: i32, %arg1: i32) -> (i32, i32) {
    %c0_i32 = arith.constant 0 : i32
    %c0_i32_0 = arith.constant 0 : i32
    %c0_i32_1 = arith.constant 0 : i32
    return %c0_i32, %c0_i32_0 : i32, i32
  }
  func.func @transform_6(%arg0: i32, %arg1: i32) -> (i32, i32) {
    %c0_i32 = arith.constant 0 : i32
    %c0_i32_0 = arith.constant 0 : i32
    %c0_i32_1 = arith.constant 0 : i32
    return %c0_i32, %c0_i32_0 : i32, i32
  }
  func.func @transform_7(%arg0: i32, %arg1: i32) -> (i32, i32) {
    %c0_i32 = arith.constant 0 : i32
    %c0_i32_0 = arith.constant 0 : i32
    %c0_i32_1 = arith.constant 0 : i32
    return %c0_i32, %c0_i32_0 : i32, i32
  }
  func.func @transform_8(%arg0: i32, %arg1: i32) -> (i32, i32) {
    %c0_i32 = arith.constant 0 : i32
    %c0_i32_0 = arith.constant 0 : i32
    %c0_i32_1 = arith.constant 0 : i32
    return %c0_i32, %c0_i32_0 : i32, i32
  }
  func.func @transform_9(%arg0: i32, %arg1: i32) -> (i32, i32) {
    %c0_i32 = arith.constant 0 : i32
    %c0_i32_0 = arith.constant 0 : i32
    %c0_i32_1 = arith.constant 0 : i32
    return %c0_i32, %c0_i32_0 : i32, i32
  }
  func.func @transform_10(%arg0: i32, %arg1: i32) -> (i32, i32, i32, i32) {
    %c0_i32 = arith.constant 0 : i32
    %c0_i32_0 = arith.constant 0 : i32
    %c0_i32_1 = arith.constant 0 : i32
    return %arg0, %arg1, %c0_i32, %c0_i32_0 : i32, i32, i32, i32
  }
}

</mosaic_0001>

<llo_original>
// kernel: tpu_custom_call.1
$region0: #{tpu_custom_call.1}
  #allocation0 [shape = 'u32[]', space=smem, size = 0x4, offset = 0x4, fixed_abs, tag = 'smem constant byte address 0x4 - core index']
  #allocation1 [shape = 'u32[144,128]{1,0:T(1,128)}', space=vmem, size = 0x12000, scoped, tag = 'internal scratch']
  #allocation2 [shape = 'bf16[6,10,128]{2,1,0:T(8,128)(2,1)}', space=vmem, size = 0x6000, scoped, tag = 'scratch operand']
  %s0 = inlined_call_operand.hbm [shape: bf16[2,22,9,256], index: 0, kind: input, shape index: {}]
  %s1 = inlined_call_operand.hbm [shape: bf16[1152,128], index: 1, kind: input, shape index: {}]
  %s2 = inlined_call_operand.hbm [shape: f32[1,128], index: 2, kind: input, shape index: {}]
  %s3 = inlined_call_operand.hbm [shape: f32[1,128], index: 3, kind: input, shape index: {}]
  %s4 = inlined_call_operand.hbm [shape: bf16[1152,128], index: 4, kind: input, shape index: {}]
  %s5 = inlined_call_operand.hbm [shape: f32[1,128], index: 5, kind: input, shape index: {}]
  %s6 = inlined_call_operand.hbm [shape: f32[1,128], index: 6, kind: input, shape index: {}]
  %s7 = inlined_call_operand.hbm [shape: bf16[128,128], index: 7, kind: input, shape index: {}]
  %s8 = inlined_call_operand.hbm [shape: f32[1,128], index: 8, kind: input, shape index: {}]
  %s9 = inlined_call_operand.hbm [shape: f32[1,128], index: 9, kind: input, shape index: {}]
  %s10 = inlined_call_operand.hbm [shape: bf16[2,8,8,128], index: 10, kind: output, shape index: {}]
  %s11 = sld [smem:[#allocation0]]
  $region121: #{tpu_custom_call.1} parent=0
    _
  %s13 = ssub.s32 1, %s11
  %s14 = scalar_select 0, %s13, %s11
  $region1: #{tpu_custom_call.1} parent=0
    #allocation3 [shape = 'u8[360448]{0}', space=vmem, size = 0x58000, scoped, tag = 'input window, operand 0']
    #allocation4 [shape = 's32[2]{0}', space=sflag, size = 0x8, scoped, tag = 'scoped memory for tpu_custom_call.1']
    #allocation5 [shape = 's32[2]{0}', space=sflag, size = 0x8, scoped, tag = 'scoped memory for tpu_custom_call.1']
    #allocation6 [shape = 'u8[294912]{0}', space=vmem, size = 0x48000, scoped, tag = 'input window, operand 1, single buffered']
    #allocation7 [shape = 's32[1]{0}', space=sflag, size = 0x4, scoped, tag = 'scoped memory for tpu_custom_call.1']
    #allocation8 [shape = 'u8[512]{0}', space=vmem, size = 0x400, scoped, tag = 'input window, operand 2, single buffered']
    #allocation9 [shape = 'u8[512]{0}', space=vmem, size = 0x400, scoped, tag = 'input window, operand 3, single buffered']
    #allocation10 [shape = 's32[1]{0}', space=sflag, size = 0x4, scoped, tag = 'scoped memory for tpu_custom_call.1']
    #allocation11 [shape = 'u8[294912]{0}', space=vmem, size = 0x48000, scoped, tag = 'input window, operand 4, single buffered']
    #allocation12 [shape = 'u8[512]{0}', space=vmem, size = 0x400, scoped, tag = 'input window, operand 5, single buffered']
    #allocation13 [shape = 's32[1]{0}', space=sflag, size = 0x4, scoped, tag = 'scoped memory for tpu_custom_call.1']
    #allocation14 [shape = 'u8[512]{0}', space=vmem, size = 0x400, scoped, tag = 'input window, operand 6, single buffered']
    #allocation15 [shape = 'u8[32768]{0}', space=vmem, size = 0x8000, scoped, tag = 'input window, operand 7, single buffered']
    #allocation16 [shape = 's32[1]{0}', space=sflag, size = 0x4, scoped, tag = 'scoped memory for tpu_custom_call.1']
    #allocation17 [shape = 'u8[512]{0}', space=vmem, size = 0x400, scoped, tag = 'input window, operand 8, single buffered']
    #allocation18 [shape = 'u8[512]{0}', space=vmem, size = 0x400, scoped, tag = 'input window, operand 9, single buffered']
    #allocation19 [shape = 's32[1]{0}', space=sflag, size = 0x4, scoped, tag = 'scoped memory for tpu_custom_call.1']
    #allocation20 [shape = 'u8[16384]{0}', space=vmem, size = 0x4000, scoped, tag = 'output window, operand 0']
    %15 = vsyncpa [#allocation4], 0
    %s16 = scalar_lea.sflag [#allocation4], 1
    %17 = vsyncpa %s16, 0
    %18 = vsyncpa [#allocation7], 0
    %19 = vsyncpa [#allocation10], 0
    %20 = vsyncpa [#allocation13], 0
    %21 = vsyncpa [#allocation16], 0
    %22 = vsyncpa [#allocation19], 0
    %23 = vsyncpa [#allocation5], 0
    %s24 = scalar_lea.sflag [#allocation5], 1
    %25 = vsyncpa %s24, 0
    loop: start=0, step=1, limit=6
    $region2: #{tpu_custom_call.1} parent=1 // loop_pre_header
      _
    $region3: #{tpu_custom_call.1} parent=1 // loop_header
      %s27 = sphi 0, %s31
      %p28 = scmp.ge.s32.totalorder %s27, 6
      %s34 = sphi 0, %s46
      %s35 = sphi 0, %s42
      %s36 = sphi 0, %s34
      %s37 = sphi 0, %s35
      %s38 = sphi 0, %s36
      %s39 = sphi 0, %s37
      %s49 = sphi 0, %s51
      %s52 = sphi 0, %s49
      %s53 = sphi 0, %s52
      %s69 = sphi 0, %s53
      %s73 = sphi 0, %s73
      %s75 = sphi 0, %s73
      %s76 = sphi 0, %s75
      %s90 = sphi 0, %s76
      %s94 = sphi 0, %s94
      %s96 = sphi 0, %s94
      %s97 = sphi 0, %s96
      %s111 = sphi 0, %s97
      %s115 = sphi 0, %s115
      %s117 = sphi 0, %s115
      %s118 = sphi 0, %s117
      %s132 = sphi 0, %s118
      %s136 = sphi 0, %s136
      %s138 = sphi 0, %s136
      %s139 = sphi 0, %s138
      %s153 = sphi 0, %s139
      %s157 = sphi 0, %s157
      %s159 = sphi 0, %s157
      %s160 = sphi 0, %s159
      %s174 = sphi 0, %s160
      %s178 = sphi 0, %s178
      %s180 = sphi 0, %s178
      %s181 = sphi 0, %s180
      %s195 = sphi 0, %s181
      %s199 = sphi 0, %s199
      %s201 = sphi 0, %s199
      %s202 = sphi 0, %s201
      %s216 = sphi 0, %s202
      %s220 = sphi 0, %s220
      %s222 = sphi 0, %s220
      %s223 = sphi 0, %s222
      %s237 = sphi 0, %s223
      %s241 = sphi 0, %s241
      %s243 = sphi 0, %s241
      %s244 = sphi 0, %s243
      %s258 = sphi 0, %s244
      %s266 = sphi 0, %s268
      %s269 = sphi 0, %s266
      %s270 = sphi 0, %s269
      %s286 = sphi 0, %s270
    $region4: #{tpu_custom_call.1} parent=1 // loop_header_branch
      %30 = sbr.rel (%p28) target = $region8
    $region5: #{tpu_custom_call.1} parent=1 // loop_body
      %s32 = ssub.s32 %s27, 1
      %s33 = ssub.s32 %s27, 2
      %s40 = sadd.s32 1, %s35
      %p41 = scmp.ge.s32.totalorder %s40, 2
      %s42 = scalar_select %p41, 0, %s40
      %s43 = sadd.s32 1, %s34
      %s44 = scalar_select %p41, %s43, %s34
      %p45 = scmp.ge.s32.totalorder %s44, 2
      %s46 = scalar_select %p45, 0, %s44
      %s47 = ssub.s32 %s34, %s46
      %p48 = scmp.eq.s32.totalorder %s47, 0
      %s50 = sadd.s32 %s49, 1
      %s51 = scalar_select %p48, %s49, %s50
      %p54 = pneg %p48
      %p55 = scmp.eq.s32.totalorder %s27, 3
      %p56 = por %p54, %p55
      %p57 = scmp.ne.s32.totalorder %s49, %s52
      %p58 = scmp.eq.s32.totalorder %s27, 0
      %p59 = por %p57, %p58
      %p60 = scmp.ne.s32.totalorder %s49, %s52
      %p61 = scmp.eq.s32.totalorder %s32, 3
      %p62 = por %p60, %p61
      %p63 = scmp.ne.s32.totalorder %s52, %s53
      %p64 = scmp.eq.s32.totalorder %s32, 0
      %p65 = por %p63, %p64
      %p66 = scmp.ne.s32.totalorder %s52, %s53
      %p67 = scmp.eq.s32.totalorder %s33, 3
      %p68 = por %p66, %p67
      %p70 = scmp.ne.s32.totalorder %s53, %s69
      %p71 = scmp.eq.s32.totalorder %s33, 0
      %p72 = por %p70, %p71
      %s74 = sadd.s32 %s73, 1
      %p77 = scmp.eq.s32.totalorder %s27, 3
      %p78 = scmp.ne.s32.totalorder %s73, %s75
      %p79 = scmp.eq.s32.totalorder %s27, 0
      %p80 = por %p78, %p79
      %p81 = scmp.ne.s32.totalorder %s73, %s75
      %p82 = scmp.eq.s32.totalorder %s32, 3
      %p83 = por %p81, %p82
      %p84 = scmp.ne.s32.totalorder %s75, %s76
      %p85 = scmp.eq.s32.totalorder %s32, 0
      %p86 = por %p84, %p85
      %p87 = scmp.ne.s32.totalorder %s75, %s76
      %p88 = scmp.eq.s32.totalorder %s33, 3
      %p89 = por %p87, %p88
      %p91 = scmp.ne.s32.totalorder %s76, %s90
      %p92 = scmp.eq.s32.totalorder %s33, 0
      %p93 = por %p91, %p92
      %s95 = sadd.s32 %s94, 1
      %p98 = scmp.eq.s32.totalorder %s27, 3
      %p99 = scmp.ne.s32.totalorder %s94, %s96
      %p100 = scmp.eq.s32.totalorder %s27, 0
      %p101 = por %p99, %p100
      %p102 = scmp.ne.s32.totalorder %s94, %s96
      %p103 = scmp.eq.s32.totalorder %s32, 3
      %p104 = por %p102, %p103
      %p105 = scmp.ne.s32.totalorder %s96, %s97
      %p106 = scmp.eq.s32.totalorder %s32, 0
      %p107 = por %p105, %p106
      %p108 = scmp.ne.s32.totalorder %s96, %s97
      %p109 = scmp.eq.s32.totalorder %s33, 3
      %p110 = por %p108, %p109
      %p112 = scmp.ne.s32.totalorder %s97, %s111
      %p113 = scmp.eq.s32.totalorder %s33, 0
      %p114 = por %p112, %p113
      %s116 = sadd.s32 %s115, 1
      %p119 = scmp.eq.s32.totalorder %s27, 3
      %p120 = scmp.ne.s32.totalorder %s115, %s117
      %p121 = scmp.eq.s32.totalorder %s27, 0
      %p122 = por %p120, %p121
      %p123 = scmp.ne.s32.totalorder %s115, %s117
      %p124 = scmp.eq.s32.totalorder %s32, 3
      %p125 = por %p123, %p124
      %p126 = scmp.ne.s32.totalorder %s117, %s118
      %p127 = scmp.eq.s32.totalorder %s32, 0
      %p128 = por %p126, %p127
      %p129 = scmp.ne.s32.totalorder %s117, %s118
      %p130 = scmp.eq.s32.totalorder %s33, 3
      %p131 = por %p129, %p130
      %p133 = scmp.ne.s32.totalorder %s118, %s132
      %p134 = scmp.eq.s32.totalorder %s33, 0
      %p135 = por %p133, %p134
      %s137 = sadd.s32 %s136, 1
      %p140 = scmp.eq.s32.totalorder %s27, 3
      %p141 = scmp.ne.s32.totalorder %s136, %s138
      %p142 = scmp.eq.s32.totalorder %s27, 0
      %p143 = por %p141, %p142
      %p144 = scmp.ne.s32.totalorder %s136, %s138
      %p145 = scmp.eq.s32.totalorder %s32, 3
      %p146 = por %p144, %p145
      %p147 = scmp.ne.s32.totalorder %s138, %s139
      %p148 = scmp.eq.s32.totalorder %s32, 0
      %p149 = por %p147, %p148
      %p150 = scmp.ne.s32.totalorder %s138, %s139
      %p151 = scmp.eq.s32.totalorder %s33, 3
      %p152 = por %p150, %p151
      %p154 = scmp.ne.s32.totalorder %s139, %s153
      %p155 = scmp.eq.s32.totalorder %s33, 0
      %p156 = por %p154, %p155
      %s158 = sadd.s32 %s157, 1
      %p161 = scmp.eq.s32.totalorder %s27, 3
      %p162 = scmp.ne.s32.totalorder %s157, %s159
      %p163 = scmp.eq.s32.totalorder %s27, 0
      %p164 = por %p162, %p163
      %p165 = scmp.ne.s32.totalorder %s157, %s159
      %p166 = scmp.eq.s32.totalorder %s32, 3
      %p167 = por %p165, %p166
      %p168 = scmp.ne.s32.totalorder %s159, %s160
      %p169 = scmp.eq.s32.totalorder %s32, 0
      %p170 = por %p168, %p169
      %p171 = scmp.ne.s32.totalorder %s159, %s160
      %p172 = scmp.eq.s32.totalorder %s33, 3
      %p173 = por %p171, %p172
      %p175 = scmp.ne.s32.totalorder %s160, %s174
      %p176 = scmp.eq.s32.totalorder %s33, 0
      %p177 = por %p175, %p176
      %s179 = sadd.s32 %s178, 1
      %p182 = scmp.eq.s32.totalorder %s27, 3
      %p183 = scmp.ne.s32.totalorder %s178, %s180
      %p184 = scmp.eq.s32.totalorder %s27, 0
      %p185 = por %p183, %p184
      %p186 = scmp.ne.s32.totalorder %s178, %s180
      %p187 = scmp.eq.s32.totalorder %s32, 3
      %p188 = por %p186, %p187
      %p189 = scmp.ne.s32.totalorder %s180, %s181
      %p190 = scmp.eq.s32.totalorder %s32, 0
      %p191 = por %p189, %p190
      %p192 = scmp.ne.s32.totalorder %s180, %s181
      %p193 = scmp.eq.s32.totalorder %s33, 3
      %p194 = por %p192, %p193
      %p196 = scmp.ne.s32.totalorder %s181, %s195
      %p197 = scmp.eq.s32.totalorder %s33, 0
      %p198 = por %p196, %p197
      %s200 = sadd.s32 %s199, 1
      %p203 = scmp.eq.s32.totalorder %s27, 3
      %p204 = scmp.ne.s32.totalorder %s199, %s201
      %p205 = scmp.eq.s32.totalorder %s27, 0
      %p206 = por %p204, %p205
      %p207 = scmp.ne.s32.totalorder %s199, %s201
      %p208 = scmp.eq.s32.totalorder %s32, 3
      %p209 = por %p207, %p208
      %p210 = scmp.ne.s32.totalorder %s201, %s202
      %p211 = scmp.eq.s32.totalorder %s32, 0
      %p212 = por %p210, %p211
      %p213 = scmp.ne.s32.totalorder %s201, %s202
      %p214 = scmp.eq.s32.totalorder %s33, 3
      %p215 = por %p213, %p214
      %p217 = scmp.ne.s32.totalorder %s202, %s216
      %p218 = scmp.eq.s32.totalorder %s33, 0
      %p219 = por %p217, %p218
      %s221 = sadd.s32 %s220, 1
      %p224 = scmp.eq.s32.totalorder %s27, 3
      %p225 = scmp.ne.s32.totalorder %s220, %s222
      %p226 = scmp.eq.s32.totalorder %s27, 0
      %p227 = por %p225, %p226
      %p228 = scmp.ne.s32.totalorder %s220, %s222
      %p229 = scmp.eq.s32.totalorder %s32, 3
      %p230 = por %p228, %p229
      %p231 = scmp.ne.s32.totalorder %s222, %s223
      %p232 = scmp.eq.s32.totalorder %s32, 0
      %p233 = por %p231, %p232
      %p234 = scmp.ne.s32.totalorder %s222, %s223
      %p235 = scmp.eq.s32.totalorder %s33, 3
      %p236 = por %p234, %p235
      %p238 = scmp.ne.s32.totalorder %s223, %s237
      %p239 = scmp.eq.s32.totalorder %s33, 0
      %p240 = por %p238, %p239
      %s242 = sadd.s32 %s241, 1
      %p245 = scmp.eq.s32.totalorder %s27, 3
      %p246 = scmp.ne.s32.totalorder %s241, %s243
      %p247 = scmp.eq.s32.totalorder %s27, 0
      %p248 = por %p246, %p247
      %p249 = scmp.ne.s32.totalorder %s241, %s243
      %p250 = scmp.eq.s32.totalorder %s32, 3
      %p251 = por %p249, %p250
      %p252 = scmp.ne.s32.totalorder %s243, %s244
      %p253 = scmp.eq.s32.totalorder %s32, 0
      %p254 = por %p252, %p253
      %p255 = scmp.ne.s32.totalorder %s243, %s244
      %p256 = scmp.eq.s32.totalorder %s33, 3
      %p257 = por %p255, %p256
      %p259 = scmp.ne.s32.totalorder %s244, %s258
      %p260 = scmp.eq.s32.totalorder %s33, 0
      %p261 = por %p259, %p260
      %s262 = ssub.s32 %s34, %s46
      %s263 = ssub.s32 %s35, %s42
      %s264 = sor.u32 %s262, %s263
      %p265 = scmp.eq.s32.totalorder %s264, 0
      %s267 = sadd.s32 %s266, 1
      %s268 = scalar_select %p265, %s266, %s267
      %p271 = pneg %p265
      %p272 = scmp.eq.s32.totalorder %s27, 3
      %p273 = por %p271, %p272
      %p274 = scmp.ne.s32.totalorder %s266, %s269
      %p275 = scmp.eq.s32.totalorder %s27, 0
      %p276 = por %p274, %p275
      %p277 = scmp.ne.s32.totalorder %s266, %s269
      %p278 = scmp.eq.s32.totalorder %s32, 3
      %p279 = por %p277, %p278
      %p280 = scmp.ne.s32.totalorder %s269, %s270
      %p281 = scmp.eq.s32.totalorder %s32, 0
      %p282 = por %p280, %p281
      %p283 = scmp.ne.s32.totalorder %s269, %s270
      %p284 = scmp.eq.s32.totalorder %s33, 3
      %p285 = por %p283, %p284
      %p287 = scmp.ne.s32.totalorder %s270, %s286
      %p288 = scmp.eq.s32.totalorder %s33, 0
      %p289 = por %p287, %p288
      %p290 = scmp.le.s32.totalorder 1, %s27
      %p291 = scmp.lt.s32.totalorder %s27, 5
      %p292 = pnand %p290, %p291
      %p293 = pneg %p292
      // Predicated region
      $region9: #{tpu_custom_call.1} parent=5 // pred_check
        _
      $region10: #{tpu_custom_call.1} parent=5 // pred_check_branch
        %295 = sbr.rel (%p292) target = $region12
      $region11: #{tpu_custom_call.1} parent=5 // pred_region
        %s296 = ssub.s32 %s27, 1
        // Predicated region
        $region13: #{tpu_custom_call.1} parent=11 // pred_check
          %p297 = pneg %p86
        $region14: #{tpu_custom_call.1} parent=11 // pred_check_branch
          %299 = sbr.rel (%p297) target = $region16
        $region15: #{tpu_custom_call.1} parent=11 // pred_region
          %s301 = ssub.s32 9216, 9216
          %302 = vsyncadd [#allocation7], %s301
          %s303 = sshll.u32 [#allocation6], 4
          %s304 = int_to_ptr.vmem [resolvable:$true] %s303
          %309 = dma.hbm_to_vmem [thread:$0]  %s1, 9216, %s304, [#allocation7], 64, 64, 4
        $region16: #{tpu_custom_call.1} parent=11 // pred_fallthru
          _
        // Predicated region
        $region17: #{tpu_custom_call.1} parent=11 // pred_check
          %p310 = pneg %p107
        $region18: #{tpu_custom_call.1} parent=11 // pred_check_branch
          %312 = sbr.rel (%p310) target = $region20
        $region19: #{tpu_custom_call.1} parent=11 // pred_region
          %s314 = ssub.s32 16, 16
          %315 = vsyncadd [#allocation7], %s314
          %s317 = sshll.u32 [#allocation8], 4
          %s318 = int_to_ptr.vmem [resolvable:$true] %s317
          %320 = dma.hbm_to_vmem [thread:$0]  %s2, 16, %s318, [#allocation7]
        $region20: #{tpu_custom_call.1} parent=11 // pred_fallthru
          _
        // Predicated region
        $region21: #{tpu_custom_call.1} parent=11 // pred_check
          %p321 = pneg %p128
        $region22: #{tpu_custom_call.1} parent=11 // pred_check_branch
          %323 = sbr.rel (%p321) target = $region24
        $region23: #{tpu_custom_call.1} parent=11 // pred_region
          %s325 = ssub.s32 16, 16
          %326 = vsyncadd [#allocation10], %s325
          %s328 = sshll.u32 [#allocation9], 4
          %s329 = int_to_ptr.vmem [resolvable:$true] %s328
          %331 = dma.hbm_to_vmem [thread:$0]  %s3, 16, %s329, [#allocation10]
        $region24: #{tpu_custom_call.1} parent=11 // pred_fallthru
          _
        // Predicated region
        $region25: #{tpu_custom_call.1} parent=11 // pred_check
          %p332 = pneg %p149
        $region26: #{tpu_custom_call.1} parent=11 // pred_check_branch
          %334 = sbr.rel (%p332) target = $region28
        $region27: #{tpu_custom_call.1} parent=11 // pred_region
          %s336 = ssub.s32 9216, 9216
          %337 = vsyncadd [#allocation10], %s336
          %s338 = sshll.u32 [#allocation11], 4
          %s339 = int_to_ptr.vmem [resolvable:$true] %s338
          %344 = dma.hbm_to_vmem [thread:$0]  %s4, 9216, %s339, [#allocation10], 64, 64, 4
        $region28: #{tpu_custom_call.1} parent=11 // pred_fallthru
          _
        // Predicated region
        $region29: #{tpu_custom_call.1} parent=11 // pred_check
          %p345 = pneg %p170
        $region30: #{tpu_custom_call.1} parent=11 // pred_check_branch
          %347 = sbr.rel (%p345) target = $region32
        $region31: #{tpu_custom_call.1} parent=11 // pred_region
          %s349 = ssub.s32 16, 16
          %350 = vsyncadd [#allocation13], %s349
          %s352 = sshll.u32 [#allocation12], 4
          %s353 = int_to_ptr.vmem [resolvable:$true] %s352
          %355 = dma.hbm_to_vmem [thread:$0]  %s5, 16, %s353, [#allocation13]
        $region32: #{tpu_custom_call.1} parent=11 // pred_fallthru
          _
        // Predicated region
        $region33: #{tpu_custom_call.1} parent=11 // pred_check
          %p356 = pneg %p191
        $region34: #{tpu_custom_call.1} parent=11 // pred_check_branch
          %358 = sbr.rel (%p356) target = $region36
        $region35: #{tpu_custom_call.1} parent=11 // pred_region
          %s360 = ssub.s32 16, 16
          %361 = vsyncadd [#allocation13], %s360
          %s363 = sshll.u32 [#allocation14], 4
          %s364 = int_to_ptr.vmem [resolvable:$true] %s363
          %366 = dma.hbm_to_vmem [thread:$0]  %s6, 16, %s364, [#allocation13]
        $region36: #{tpu_custom_call.1} parent=11 // pred_fallthru
          _
        // Predicated region
        $region37: #{tpu_custom_call.1} parent=11 // pred_check
          %p367 = pneg %p212
        $region38: #{tpu_custom_call.1} parent=11 // pred_check_branch
          %369 = sbr.rel (%p367) target = $region40
        $region39: #{tpu_custom_call.1} parent=11 // pred_region
          %s371 = ssub.s32 1024, 1024
          %372 = vsyncadd [#allocation16], %s371
          %s373 = sshll.u32 [#allocation15], 4
          %s374 = int_to_ptr.vmem [resolvable:$true] %s373
          %379 = dma.hbm_to_vmem [thread:$0]  %s7, 1024, %s374, [#allocation16], 64, 64, 4
        $region40: #{tpu_custom_call.1} parent=11 // pred_fallthru
          _
        // Predicated region
        $region41: #{tpu_custom_call.1} parent=11 // pred_check
          %p380 = pneg %p233
        $region42: #{tpu_custom_call.1} parent=11 // pred_check_branch
          %382 = sbr.rel (%p380) target = $region44
        $region43: #{tpu_custom_call.1} parent=11 // pred_region
          %s384 = ssub.s32 16, 16
          %385 = vsyncadd [#allocation16], %s384
          %s387 = sshll.u32 [#allocation17], 4
          %s388 = int_to_ptr.vmem [resolvable:$true] %s387
          %390 = dma.hbm_to_vmem [thread:$0]  %s8, 16, %s388, [#allocation16]
        $region44: #{tpu_custom_call.1} parent=11 // pred_fallthru
          _
        // Predicated region
        $region45: #{tpu_custom_call.1} parent=11 // pred_check
          %p391 = pneg %p254
        $region46: #{tpu_custom_call.1} parent=11 // pred_check_branch
          %393 = sbr.rel (%p391) target = $region48
        $region47: #{tpu_custom_call.1} parent=11 // pred_region
          %s395 = ssub.s32 16, 16
          %396 = vsyncadd [#allocation19], %s395
          %s398 = sshll.u32 [#allocation18], 4
          %s399 = int_to_ptr.vmem [resolvable:$true] %s398
          %401 = dma.hbm_to_vmem [thread:$0]  %s9, 16, %s399, [#allocation19]
        $region48: #{tpu_custom_call.1} parent=11 // pred_fallthru
          _
      $region12: #{tpu_custom_call.1} parent=5 // pred_fallthru
        _
      %p402 = scmp.lt.s32.totalorder %s27, 4
      // Predicated region
      $region49: #{tpu_custom_call.1} parent=5 // pred_check
        %p403 = pneg %p402
      $region50: #{tpu_custom_call.1} parent=5 // pred_check_branch
        %405 = sbr.rel (%p403) target = $region52
      $region51: #{tpu_custom_call.1} parent=5 // pred_region
        // Predicated region
        $region53: #{tpu_custom_call.1} parent=51 // pred_check
          %p406 = pneg %p59
        $region54: #{tpu_custom_call.1} parent=51 // pred_check_branch
          %408 = sbr.rel (%p406) target = $region56
        $region55: #{tpu_custom_call.1} parent=51 // pred_region
          %s409 = sand.u32 %s49, 1
          %s410 = scalar_lea.sflag [#allocation4], %s409
          %s411 = sand.u32 %s49, 1
          %s412 = smul.addr %s411, 352
          %s413 = scalar_lea.vmem [#allocation3], %s412
          %s415 = ssub.s32 5632, 5632
          %416 = vsyncadd %s410, %s415
          %s417 = smul.addr %s34, 88
          %s418 = smul.addr %s417, 64
          %s419 = scalar_lea.hbm %s0, %s418
          %s420 = sshll.u32 %s413, 4
          %s421 = int_to_ptr.vmem [resolvable:$true] %s420
          %426 = dma.hbm_to_vmem [thread:$0]  %s419, 5632, %s421, %s410, 128, 128, 8
        $region56: #{tpu_custom_call.1} parent=51 // pred_fallthru
          _
      $region52: #{tpu_custom_call.1} parent=5 // pred_fallthru
        _
      %p427 = scmp.le.s32.totalorder 1, %s27
      %p428 = scmp.lt.s32.totalorder %s27, 5
      %p429 = pnand %p427, %p428
      %p430 = pneg %p429
      // Predicated region
      $region57: #{tpu_custom_call.1} parent=5 // pred_check
        _
      $region58: #{tpu_custom_call.1} parent=5 // pred_check_branch
        %432 = sbr.rel (%p429) target = $region60
      $region59: #{tpu_custom_call.1} parent=5 // pred_region
        %s433 = ssub.s32 %s27, 1
        %s434 = sand.u32 %s52, 1
        %s435 = scalar_lea.sflag [#allocation4], %s434
        %s436 = sand.u32 %s52, 1
        %s437 = smul.addr %s436, 352
        %s438 = scalar_lea.vmem [#allocation3], %s437
        // Predicated region
        $region61: #{tpu_custom_call.1} parent=59 // pred_check
          %p439 = pneg %p65
        $region62: #{tpu_custom_call.1} parent=59 // pred_check_branch
          %441 = sbr.rel (%p439) target = $region64
        $region63: #{tpu_custom_call.1} parent=59 // pred_region
          %442 = dma.done %s435, 5632
        $region64: #{tpu_custom_call.1} parent=59 // pred_fallthru
          _
        // Predicated region
        $region65: #{tpu_custom_call.1} parent=59 // pred_check
          %p443 = pneg %p86
        $region66: #{tpu_custom_call.1} parent=59 // pred_check_branch
          %445 = sbr.rel (%p443) target = $region68
        $region67: #{tpu_custom_call.1} parent=59 // pred_region
          %446 = dma.done [#allocation7], 9216
        $region68: #{tpu_custom_call.1} parent=59 // pred_fallthru
          _
        // Predicated region
        $region69: #{tpu_custom_call.1} parent=59 // pred_check
          %p447 = pneg %p107
        $region70: #{tpu_custom_call.1} parent=59 // pred_check_branch
          %449 = sbr.rel (%p447) target = $region72
        $region71: #{tpu_custom_call.1} parent=59 // pred_region
          %450 = dma.done [#allocation7], 16
        $region72: #{tpu_custom_call.1} parent=59 // pred_fallthru
          _
        // Predicated region
        $region73: #{tpu_custom_call.1} parent=59 // pred_check
          %p451 = pneg %p128
        $region74: #{tpu_custom_call.1} parent=59 // pred_check_branch
          %453 = sbr.rel (%p451) target = $region76
        $region75: #{tpu_custom_call.1} parent=59 // pred_region
          %454 = dma.done [#allocation10], 16
        $region76: #{tpu_custom_call.1} parent=59 // pred_fallthru
          _
        // Predicated region
        $region77: #{tpu_custom_call.1} parent=59 // pred_check
          %p455 = pneg %p149
        $region78: #{tpu_custom_call.1} parent=59 // pred_check_branch
          %457 = sbr.rel (%p455) target = $region80
        $region79: #{tpu_custom_call.1} parent=59 // pred_region
          %458 = dma.done [#allocation10], 9216
        $region80: #{tpu_custom_call.1} parent=59 // pred_fallthru
          _
        // Predicated region
        $region81: #{tpu_custom_call.1} parent=59 // pred_check
          %p459 = pneg %p170
        $region82: #{tpu_custom_call.1} parent=59 // pred_check_branch
          %461 = sbr.rel (%p459) target = $region84
        $region83: #{tpu_custom_call.1} parent=59 // pred_region
          %462 = dma.done [#allocation13], 16
        $region84: #{tpu_custom_call.1} parent=59 // pred_fallthru
          _
        // Predicated region
        $region85: #{tpu_custom_call.1} parent=59 // pred_check
          %p463 = pneg %p191
        $region86: #{tpu_custom_call.1} parent=59 // pred_check_branch
          %465 = sbr.rel (%p463) target = $region88
        $region87: #{tpu_custom_call.1} parent=59 // pred_region
          %466 = dma.done [#allocation13], 16
        $region88: #{tpu_custom_call.1} parent=59 // pred_fallthru
          _
        // Predicated region
        $region89: #{tpu_custom_call.1} parent=59 // pred_check
          %p467 = pneg %p212
        $region90: #{tpu_custom_call.1} parent=59 // pred_check_branch
          %469 = sbr.rel (%p467) target = $region92
        $region91: #{tpu_custom_call.1} parent=59 // pred_region
          %470 = dma.done [#allocation16], 1024
        $region92: #{tpu_custom_call.1} parent=59 // pred_fallthru
          _
        // Predicated region
        $region93: #{tpu_custom_call.1} parent=59 // pred_check
          %p471 = pneg %p233
        $region94: #{tpu_custom_call.1} parent=59 // pred_check_branch
          %473 = sbr.rel (%p471) target = $region96
        $region95: #{tpu_custom_call.1} parent=59 // pred_region
          %474 = dma.done [#allocation16], 16
        $region96: #{tpu_custom_call.1} parent=59 // pred_fallthru
          _
        // Predicated region
        $region97: #{tpu_custom_call.1} parent=59 // pred_check
          %p475 = pneg %p254
        $region98: #{tpu_custom_call.1} parent=59 // pred_check_branch
          %477 = sbr.rel (%p475) target = $region100
        $region99: #{tpu_custom_call.1} parent=59 // pred_region
          %478 = dma.done [#allocation19], 16
        $region100: #{tpu_custom_call.1} parent=59 // pred_fallthru
          _
        %s479 = sand.u32 %s52, 1
        %s480 = scalar_lea.sflag [#allocation4], %s479
        %s481 = sand.u32 %s52, 1
        %s482 = smul.addr %s481, 352
        %s483 = scalar_lea.vmem [#allocation3], %s482
        %p484 = pneg %p65
        %p485 = pneg %p62
        %p486 = pneg %p86
        %p487 = pneg %p83
        %p488 = pneg %p107
        %p489 = pneg %p104
        %p490 = pneg %p128
        %p491 = pneg %p125
        %p492 = pneg %p149
        %p493 = pneg %p146
        %p494 = pneg %p170
        %p495 = pneg %p167
        %p496 = pneg %p191
        %p497 = pneg %p188
        %p498 = pneg %p212
        %p499 = pneg %p209
        %p500 = pneg %p233
        %p501 = pneg %p230
        %p502 = pneg %p254
        %p503 = pneg %p251
        %p504 = pneg %p282
        %p505 = pneg %p279
        %s506 = sand.u32 %s269, 1
        %s507 = scalar_lea.sflag [#allocation5], %s506
        %s508 = sand.u32 %s269, 1
        %s509 = smul.addr %s508, 16
        %s510 = scalar_lea.vmem [#allocation20], %s509
        %s511 = smul.u32 4, %s37
        %s513 = smul.u32 %s37, 8
        %s514 = smul.u32 %s513, 4
        %s515 = smul.addr %s514, 4
        %s516 = scalar_lea.vmem %s438, %s515 [#allocation3]
        %v517 = vld [vmem:[%s516] sm:$0xff]
        %v518 = vld [vmem:[%s516 + $0x8] sm:$0x11]
        %v519 = vld [vmem:[%s516 + $0x10] sm:$0xff]
        %v520 = vld [vmem:[%s516 + $0x18] sm:$0x11]
        %v521 = vld [vmem:[%s516 + $0x20] sm:$0xff]
        %v522 = vld [vmem:[%s516 + $0x28] sm:$0x11]
        %v523 = vld [vmem:[%s516 + $0x30] sm:$0xff]
        %v524 = vld [vmem:[%s516 + $0x38] sm:$0x11]
        %v525 = vld [vmem:[%s516 + $0x40] sm:$0xff]
        %v526 = vld [vmem:[%s516 + $0x48] sm:$0x11]
        %v527 = vld [vmem:[%s516 + $0x50] sm:$0xff]
        %v528 = vld [vmem:[%s516 + $0x58] sm:$0x11]
        %v529 = vld [vmem:[%s516 + $0x60] sm:$0xff]
        %v530 = vld [vmem:[%s516 + $0x68] sm:$0x11]
        %v531 = vld [vmem:[%s516 + $0x70] sm:$0xff]
        %v532 = vld [vmem:[%s516 + $0x78] sm:$0x11]
        %v533 = vld [vmem:[%s516 + $0x80] sm:$0xff]
        %v534 = vld [vmem:[%s516 + $0x88] sm:$0x11]
        %v535 = vld [vmem:[%s516 + $0x90] sm:$0xff]
        %v536 = vld [vmem:[%s516 + $0x98] sm:$0x11]
        %v537 = vld [vmem:[%s516 + $0xa0] sm:$0xff]
        %v538 = vld [vmem:[%s516 + $0xa8] sm:$0x11]
        %v539 = vld [vmem:[%s516 + $0xb0] sm:$0xff]
        %v540 = vld [vmem:[%s516 + $0xb8] sm:$0x11]
        %v541 = vld [vmem:[%s516 + $0xc0] sm:$0xff]
        %v542 = vld [vmem:[%s516 + $0xc8] sm:$0x11]
        %v549 = vunpack.c.l.b16 %v517
        %v550 = vunpack.c.h.b16 %v517
        %v551 = vunpack.c.l.b16 %v521
        %v552 = vunpack.c.h.b16 %v521
        %v553 = vunpack.c.l.b16 %v525
        %v554 = vunpack.c.h.b16 %v525
        %v555 = vunpack.c.l.b16 %v529
        %v556 = vunpack.c.h.b16 %v529
        %v557 = vunpack.c.l.b16 %v533
        %v558 = vunpack.c.h.b16 %v533
        %v559 = vunpack.c.l.b16 %v537
        %v560 = vunpack.c.h.b16 %v537
        %v567 = vunpack.c.l.b16 %v518
        %v568 = vunpack.c.l.b16 %v522
        %v569 = vunpack.c.l.b16 %v526
        %v570 = vunpack.c.l.b16 %v530
        %v571 = vunpack.c.l.b16 %v534
        %v572 = vunpack.c.l.b16 %v538
        %v573 = vpack.c.b16 %v567, %v549
        %v574 = vpack.c.b16 %v568, %v551
        %v575 = vpack.c.b16 %v569, %v553
        %v576 = vpack.c.b16 %v570, %v555
        %v577 = vpack.c.b16 %v571, %v557
        %v578 = vpack.c.b16 %v572, %v559
        %v580 = vshrl.u32 %v573, 16
        %v582 = vshll.u32 %v573, 16
        %v584 = vrot.slane %v582, 1
        %v585 = vor.u32 %v580, %v584
        %v587 = vshrl.u32 %v574, 16
        %v589 = vshll.u32 %v574, 16
        %v591 = vrot.slane %v589, 1
        %v592 = vor.u32 %v587, %v591
        %v594 = vshrl.u32 %v575, 16
        %v596 = vshll.u32 %v575, 16
        %v598 = vrot.slane %v596, 1
        %v599 = vor.u32 %v594, %v598
        %v601 = vshrl.u32 %v576, 16
        %v603 = vshll.u32 %v576, 16
        %v605 = vrot.slane %v603, 1
        %v606 = vor.u32 %v601, %v605
        %v608 = vshrl.u32 %v577, 16
        %v610 = vshll.u32 %v577, 16
        %v612 = vrot.slane %v610, 1
        %v613 = vor.u32 %v608, %v612
        %v615 = vshrl.u32 %v578, 16
        %v617 = vshll.u32 %v578, 16
        %v619 = vrot.slane %v617, 1
        %v620 = vor.u32 %v615, %v619
        %v627 = vunpack.c.l.b16 %v519
        %v628 = vunpack.c.h.b16 %v519
        %v629 = vunpack.c.l.b16 %v523
        %v630 = vunpack.c.h.b16 %v523
        %v631 = vunpack.c.l.b16 %v527
        %v632 = vunpack.c.h.b16 %v527
        %v633 = vunpack.c.l.b16 %v531
        %v634 = vunpack.c.h.b16 %v531
        %v635 = vunpack.c.l.b16 %v535
        %v636 = vunpack.c.h.b16 %v535
        %v637 = vunpack.c.l.b16 %v539
        %v638 = vunpack.c.h.b16 %v539
        %v645 = vunpack.c.l.b16 %v520
        %v646 = vunpack.c.l.b16 %v524
        %v647 = vunpack.c.l.b16 %v528
        %v648 = vunpack.c.l.b16 %v532
        %v649 = vunpack.c.l.b16 %v536
        %v650 = vunpack.c.l.b16 %v540
        %v651 = vpack.c.b16 %v645, %v627
        %v652 = vpack.c.b16 %v646, %v629
        %v653 = vpack.c.b16 %v647, %v631
        %v654 = vpack.c.b16 %v648, %v633
        %v655 = vpack.c.b16 %v649, %v635
        %v656 = vpack.c.b16 %v650, %v637
        %v658 = vshrl.u32 %v651, 16
        %v660 = vshll.u32 %v651, 16
        %v662 = vrot.slane %v660, 1
        %v663 = vor.u32 %v658, %v662
        %v665 = vshrl.u32 %v652, 16
        %v667 = vshll.u32 %v652, 16
        %v669 = vrot.slane %v667, 1
        %v670 = vor.u32 %v665, %v669
        %v672 = vshrl.u32 %v653, 16
        %v674 = vshll.u32 %v653, 16
        %v676 = vrot.slane %v674, 1
        %v677 = vor.u32 %v672, %v676
        %v679 = vshrl.u32 %v654, 16
        %v681 = vshll.u32 %v654, 16
        %v683 = vrot.slane %v681, 1
        %v684 = vor.u32 %v679, %v683
        %v686 = vshrl.u32 %v655, 16
        %v688 = vshll.u32 %v655, 16
        %v690 = vrot.slane %v688, 1
        %v691 = vor.u32 %v686, %v690
        %v693 = vshrl.u32 %v656, 16
        %v695 = vshll.u32 %v656, 16
        %v697 = vrot.slane %v695, 1
        %v698 = vor.u32 %v693, %v697
        %v700 = vunpack.c.l.b16 %v541
        %v701 = vunpack.c.h.b16 %v541
        %v703 = vunpack.c.l.b16 %v542
        %v704 = vpack.c.b16 %v703, %v700
        %v706 = vshrl.u32 %v704, 16
        %v708 = vshll.u32 %v704, 16
        %v710 = vrot.slane %v708, 1
        %v711 = vor.u32 %v706, %v710
        %v712 = vunpack.c.l.b16 %v585
        %v713 = vunpack.c.l.b16 %v663
        %v714 = vunpack.c.l.b16 %v592
        %v715 = vunpack.c.l.b16 %v670
        %v716 = vunpack.c.l.b16 %v599
        %v717 = vunpack.c.l.b16 %v677
        %v718 = vunpack.c.l.b16 %v606
        %v719 = vunpack.c.l.b16 %v684
        %v720 = vunpack.c.l.b16 %v613
        %v721 = vunpack.c.l.b16 %v691
        %v722 = vunpack.c.l.b16 %v620
        %v723 = vunpack.c.l.b16 %v698
        %v724 = vunpack.c.l.b16 %v711
        %v725 = vld [vmem:[#allocation6] sm:$0xf]
        %v726 = vld [vmem:[#allocation6 + $0x4] sm:$0xf]
        %v727 = vld [vmem:[#allocation6 + $0x8] sm:$0xf]
        %v728 = vld [vmem:[#allocation6 + $0xc] sm:$0xf]
        %v729 = vld [vmem:[#allocation6 + $0x10] sm:$0xf]
        %v730 = vld [vmem:[#allocation6 + $0x14] sm:$0xf]
        %v731 = vld [vmem:[#allocation6 + $0x18] sm:$0xf]
        %v732 = vld [vmem:[#allocation6 + $0x1c] sm:$0xf]
        %v733 = vld [vmem:[#allocation6 + $0x20] sm:$0xf]
        %v734 = vld [vmem:[#allocation6 + $0x24] sm:$0xf]
        %v735 = vld [vmem:[#allocation6 + $0x28] sm:$0xf]
        %v736 = vld [vmem:[#allocation6 + $0x2c] sm:$0xf]
        %v737 = vld [vmem:[#allocation6 + $0x30] sm:$0xf]
        %v738 = vld [vmem:[#allocation6 + $0x34] sm:$0xf]
        %v739 = vld [vmem:[#allocation6 + $0x38] sm:$0xf]
        %v740 = vld [vmem:[#allocation6 + $0x3c] sm:$0xf]
        %v741 = vld [vmem:[#allocation6 + $0x40] sm:$0xf]
        %v742 = vld [vmem:[#allocation6 + $0x44] sm:$0xf]
        %v743 = vld [vmem:[#allocation6 + $0x48] sm:$0xf]
        %v744 = vld [vmem:[#allocation6 + $0x4c] sm:$0xf]
        %v745 = vld [vmem:[#allocation6 + $0x50] sm:$0xf]
        %v746 = vld [vmem:[#allocation6 + $0x54] sm:$0xf]
        %v747 = vld [vmem:[#allocation6 + $0x58] sm:$0xf]
        %v748 = vld [vmem:[#allocation6 + $0x5c] sm:$0xf]
        %v749 = vld [vmem:[#allocation6 + $0x60] sm:$0xf]
        %v750 = vld [vmem:[#allocation6 + $0x64] sm:$0xf]
        %v751 = vld [vmem:[#allocation6 + $0x68] sm:$0xf]
        %v752 = vld [vmem:[#allocation6 + $0x6c] sm:$0xf]
        %v753 = vld [vmem:[#allocation6 + $0x70] sm:$0xf]
        %v754 = vld [vmem:[#allocation6 + $0x74] sm:$0xf]
        %v755 = vld [vmem:[#allocation6 + $0x78] sm:$0xf]
        %v756 = vld [vmem:[#allocation6 + $0x7c] sm:$0xf]
        %v757 = vld [vmem:[#allocation6 + $0x80] sm:$0xf]
        %v758 = vld [vmem:[#allocation6 + $0x84] sm:$0xf]
        %v759 = vld [vmem:[#allocation6 + $0x88] sm:$0xf]
        %v760 = vld [vmem:[#allocation6 + $0x8c] sm:$0xf]
        %v761 = vld [vmem:[#allocation6 + $0x90] sm:$0xf]
        %v762 = vld [vmem:[#allocation6 + $0x94] sm:$0xf]
        %v763 = vld [vmem:[#allocation6 + $0x98] sm:$0xf]
        %v764 = vld [vmem:[#allocation6 + $0x9c] sm:$0xf]
        %v765 = vld [vmem:[#allocation6 + $0xa0] sm:$0xf]
        %v766 = vld [vmem:[#allocation6 + $0xa4] sm:$0xf]
        %v767 = vld [vmem:[#allocation6 + $0xa8] sm:$0xf]
        %v768 = vld [vmem:[#allocation6 + $0xac] sm:$0xf]
        %v769 = vld [vmem:[#allocation6 + $0xb0] sm:$0xf]
        %v770 = vld [vmem:[#allocation6 + $0xb4] sm:$0xf]
        %v771 = vld [vmem:[#allocation6 + $0xb8] sm:$0xf]
        %v772 = vld [vmem:[#allocation6 + $0xbc] sm:$0xf]
        %v773 = vld [vmem:[#allocation6 + $0xc0] sm:$0xf]
        %v774 = vld [vmem:[#allocation6 + $0xc4] sm:$0xf]
        %v775 = vld [vmem:[#allocation6 + $0xc8] sm:$0xf]
        %v776 = vld [vmem:[#allocation6 + $0xcc] sm:$0xf]
        %v777 = vld [vmem:[#allocation6 + $0xd0] sm:$0xf]
        %v778 = vld [vmem:[#allocation6 + $0xd4] sm:$0xf]
        %v779 = vld [vmem:[#allocation6 + $0xd8] sm:$0xf]
        %v780 = vld [vmem:[#allocation6 + $0xdc] sm:$0xf]
        %v781 = vld [vmem:[#allocation6 + $0xe0] sm:$0xf]
        %v782 = vld [vmem:[#allocation6 + $0xe4] sm:$0xf]
        %v783 = vld [vmem:[#allocation6 + $0xe8] sm:$0xf]
        %v784 = vld [vmem:[#allocation6 + $0xec] sm:$0xf]
        %v785 = vld [vmem:[#allocation6 + $0xf0] sm:$0xf]
        %v786 = vld [vmem:[#allocation6 + $0xf4] sm:$0xf]
        %v787 = vld [vmem:[#allocation6 + $0xf8] sm:$0xf]
        %v788 = vld [vmem:[#allocation6 + $0xfc] sm:$0xf]
        %v789 = vld [vmem:[#allocation6 + $0x100] sm:$0xf]
        %v790 = vld [vmem:[#allocation6 + $0x104] sm:$0xf]
        %v791 = vld [vmem:[#allocation6 + $0x108] sm:$0xf]
        %v792 = vld [vmem:[#allocation6 + $0x10c] sm:$0xf]
        %v793 = vld [vmem:[#allocation6 + $0x110] sm:$0xf]
        %v794 = vld [vmem:[#allocation6 + $0x114] sm:$0xf]
        %v795 = vld [vmem:[#allocation6 + $0x118] sm:$0xf]
        %v796 = vld [vmem:[#allocation6 + $0x11c] sm:$0xf]
        %v797 = vld [vmem:[#allocation6 + $0x120] sm:$0xf]
        %v798 = vld [vmem:[#allocation6 + $0x124] sm:$0xf]
        %v799 = vld [vmem:[#allocation6 + $0x128] sm:$0xf]
        %v800 = vld [vmem:[#allocation6 + $0x12c] sm:$0xf]
        %v801 = vld [vmem:[#allocation6 + $0x130] sm:$0xf]
        %v802 = vld [vmem:[#allocation6 + $0x134] sm:$0xf]
        %v803 = vld [vmem:[#allocation6 + $0x138] sm:$0xf]
        %v804 = vld [vmem:[#allocation6 + $0x13c] sm:$0xf]
        %v805 = vld [vmem:[#allocation6 + $0x140] sm:$0xf]
        %v806 = vld [vmem:[#allocation6 + $0x144] sm:$0xf]
        %v807 = vld [vmem:[#allocation6 + $0x148] sm:$0xf]
        %v808 = vld [vmem:[#allocation6 + $0x14c] sm:$0xf]
        %v809 = vld [vmem:[#allocation6 + $0x150] sm:$0xf]
        %v810 = vld [vmem:[#allocation6 + $0x154] sm:$0xf]
        %v811 = vld [vmem:[#allocation6 + $0x158] sm:$0xf]
        %v812 = vld [vmem:[#allocation6 + $0x15c] sm:$0xf]
        %v813 = vld [vmem:[#allocation6 + $0x160] sm:$0xf]
        %v814 = vld [vmem:[#allocation6 + $0x164] sm:$0xf]
        %v815 = vld [vmem:[#allocation6 + $0x168] sm:$0xf]
        %v816 = vld [vmem:[#allocation6 + $0x16c] sm:$0xf]
        %v817 = vld [vmem:[#allocation6 + $0x170] sm:$0xf]
        %v818 = vld [vmem:[#allocation6 + $0x174] sm:$0xf]
        %v819 = vld [vmem:[#allocation6 + $0x178] sm:$0xf]
        %v820 = vld [vmem:[#allocation6 + $0x17c] sm:$0xf]
        %v821 = vld [vmem:[#allocation6 + $0x180] sm:$0xf]
        %v822 = vld [vmem:[#allocation6 + $0x184] sm:$0xf]
        %v823 = vld [vmem:[#allocation6 + $0x188] sm:$0xf]
        %v824 = vld [vmem:[#allocation6 + $0x18c] sm:$0xf]
        %v825 = vld [vmem:[#allocation6 + $0x190] sm:$0xf]
        %v826 = vld [vmem:[#allocation6 + $0x194] sm:$0xf]
        %v827 = vld [vmem:[#allocation6 + $0x198] sm:$0xf]
        %v828 = vld [vmem:[#allocation6 + $0x19c] sm:$0xf]
        %v829 = vld [vmem:[#allocation6 + $0x1a0] sm:$0xf]
        %v830 = vld [vmem:[#allocation6 + $0x1a4] sm:$0xf]
        %v831 = vld [vmem:[#allocation6 + $0x1a8] sm:$0xf]
        %v832 = vld [vmem:[#allocation6 + $0x1ac] sm:$0xf]
        %v833 = vld [vmem:[#allocation6 + $0x1b0] sm:$0xf]
        %v834 = vld [vmem:[#allocation6 + $0x1b4] sm:$0xf]
        %v835 = vld [vmem:[#allocation6 + $0x1b8] sm:$0xf]
        %v836 = vld [vmem:[#allocation6 + $0x1bc] sm:$0xf]
        %v837 = vld [vmem:[#allocation6 + $0x1c0] sm:$0xf]
        %v838 = vld [vmem:[#allocation6 + $0x1c4] sm:$0xf]
        %v839 = vld [vmem:[#allocation6 + $0x1c8] sm:$0xf]
        %v840 = vld [vmem:[#allocation6 + $0x1cc] sm:$0xf]
        %v841 = vld [vmem:[#allocation6 + $0x1d0] sm:$0xf]
        %v842 = vld [vmem:[#allocation6 + $0x1d4] sm:$0xf]
        %v843 = vld [vmem:[#allocation6 + $0x1d8] sm:$0xf]
        %v844 = vld [vmem:[#allocation6 + $0x1dc] sm:$0xf]
        %v845 = vld [vmem:[#allocation6 + $0x1e0] sm:$0xf]
        %v846 = vld [vmem:[#allocation6 + $0x1e4] sm:$0xf]
        %v847 = vld [vmem:[#allocation6 + $0x1e8] sm:$0xf]
        %v848 = vld [vmem:[#allocation6 + $0x1ec] sm:$0xf]
        %v849 = vld [vmem:[#allocation6 + $0x1f0] sm:$0xf]
        %v850 = vld [vmem:[#allocation6 + $0x1f4] sm:$0xf]
        %v851 = vld [vmem:[#allocation6 + $0x1f8] sm:$0xf]
        %v852 = vld [vmem:[#allocation6 + $0x1fc] sm:$0xf]
        %v853 = vld [vmem:[#allocation6 + $0x200] sm:$0xf]
        %v854 = vld [vmem:[#allocation6 + $0x204] sm:$0xf]
        %v855 = vld [vmem:[#allocation6 + $0x208] sm:$0xf]
        %v856 = vld [vmem:[#allocation6 + $0x20c] sm:$0xf]
        %v857 = vld [vmem:[#allocation6 + $0x210] sm:$0xf]
        %v858 = vld [vmem:[#allocation6 + $0x214] sm:$0xf]
        %v859 = vld [vmem:[#allocation6 + $0x218] sm:$0xf]
        %v860 = vld [vmem:[#allocation6 + $0x21c] sm:$0xf]
        %v861 = vld [vmem:[#allocation6 + $0x220] sm:$0xf]
        %v862 = vld [vmem:[#allocation6 + $0x224] sm:$0xf]
        %v863 = vld [vmem:[#allocation6 + $0x228] sm:$0xf]
        %v864 = vld [vmem:[#allocation6 + $0x22c] sm:$0xf]
        %v865 = vld [vmem:[#allocation6 + $0x230] sm:$0xf]
        %v866 = vld [vmem:[#allocation6 + $0x234] sm:$0xf]
        %v867 = vld [vmem:[#allocation6 + $0x238] sm:$0xf]
        %v868 = vld [vmem:[#allocation6 + $0x23c] sm:$0xf]
        %v869 = vpack.c.b16 %v551, %v549
        %v870 = vpack.c.b16 %v552, %v550
        %v871 = vpack.c.b16 %v714, %v712
        %v872 = vpack.c.b16 %v629, %v627
        %v873 = vpack.c.b16 %v630, %v628
        %v874 = vpack.c.b16 %v715, %v713
        %v875 = vpack.c.b16 %v553, %v551
        %v876 = vpack.c.b16 %v554, %v552
        %v877 = vpack.c.b16 %v716, %v714
        %v878 = vpack.c.b16 %v555, %v553
        %v879 = vpack.c.b16 %v556, %v554
        %v880 = vpack.c.b16 %v718, %v716
        %v881 = vpack.c.b16 %v633, %v631
        %v882 = vpack.c.b16 %v634, %v632
        %v883 = vpack.c.b16 %v719, %v717
        %v884 = vpack.c.b16 %v557, %v555
        %v885 = vpack.c.b16 %v558, %v556
        %v886 = vpack.c.b16 %v720, %v718
        %v887 = vpack.c.b16 %v559, %v557
        %v888 = vpack.c.b16 %v560, %v558
        %v889 = vpack.c.b16 %v722, %v720
        %v890 = vpack.c.b16 %v637, %v635
        %v891 = vpack.c.b16 %v638, %v636
        %v892 = vpack.c.b16 %v723, %v721
        %v893 = vpack.c.b16 %v700, %v559
        %v894 = vpack.c.b16 %v701, %v560
        %v895 = vpack.c.b16 %v724, %v722
        %v1067 = vunpack.c.l.b16 %v725
        %v1068 = vunpack.c.l.b16 %v726
        %v1069 = vunpack.c.l.b16 %v727
        %v1070 = vunpack.c.l.b16 %v728
        %v1071 = vunpack.c.l.b16 %v729
        %v1072 = vunpack.c.l.b16 %v730
        %v1073 = vunpack.c.l.b16 %v731
        %v1074 = vunpack.c.l.b16 %v732
        %v1075 = vunpack.c.l.b16 %v733
        %v1076 = vunpack.c.l.b16 %v734
        %v1077 = vunpack.c.l.b16 %v735
        %v1078 = vunpack.c.l.b16 %v736
        %v1079 = vunpack.c.l.b16 %v737
        %v1080 = vunpack.c.l.b16 %v738
        %v1081 = vunpack.c.l.b16 %v739
        %v1082 = vunpack.c.l.b16 %v740
        %v1083 = vunpack.c.l.b16 %v741
        %v1084 = vunpack.c.l.b16 %v742
        %v1085 = vunpack.c.l.b16 %v743
        %v1086 = vunpack.c.l.b16 %v744
        %v1087 = vunpack.c.l.b16 %v745
        %v1088 = vunpack.c.l.b16 %v746
        %v1089 = vunpack.c.l.b16 %v747
        %v1090 = vunpack.c.l.b16 %v748
        %v1091 = vunpack.c.l.b16 %v749
        %v1092 = vunpack.c.l.b16 %v750
        %v1093 = vunpack.c.l.b16 %v751
        %v1094 = vunpack.c.l.b16 %v752
        %v1095 = vunpack.c.l.b16 %v753
        %v1096 = vunpack.c.l.b16 %v754
        %v1097 = vunpack.c.l.b16 %v755
        %v1098 = vunpack.c.l.b16 %v756
        %v1099 = vunpack.c.l.b16 %v757
        %v1100 = vunpack.c.l.b16 %v758
        %v1101 = vunpack.c.l.b16 %v759
        %v1102 = vunpack.c.l.b16 %v760
        %v1103 = vunpack.c.l.b16 %v761
        %v1104 = vunpack.c.l.b16 %v762
        %v1105 = vunpack.c.l.b16 %v763
        %v1106 = vunpack.c.l.b16 %v764
        %v1107 = vunpack.c.l.b16 %v765
        %v1108 = vunpack.c.l.b16 %v766
        %v1109 = vunpack.c.l.b16 %v767
        %v1110 = vunpack.c.l.b16 %v768
        %v1111 = vunpack.c.l.b16 %v769
        %v1112 = vunpack.c.l.b16 %v770
        %v1113 = vunpack.c.l.b16 %v771
        %v1114 = vunpack.c.l.b16 %v772
        %v1115 = vunpack.c.l.b16 %v773
        %v1116 = vunpack.c.l.b16 %v774
        %v1117 = vunpack.c.l.b16 %v775
        %v1118 = vunpack.c.l.b16 %v776
        %v1119 = vunpack.c.l.b16 %v777
        %v1120 = vunpack.c.l.b16 %v778
        %v1121 = vunpack.c.l.b16 %v779
        %v1122 = vunpack.c.l.b16 %v780
        %v1123 = vunpack.c.l.b16 %v781
        %v1124 = vunpack.c.l.b16 %v782
        %v1125 = vunpack.c.l.b16 %v783
        %v1126 = vunpack.c.l.b16 %v784
        %v1127 = vunpack.c.l.b16 %v785
        %v1128 = vunpack.c.l.b16 %v786
        %v1129 = vunpack.c.l.b16 %v787
        %v1130 = vunpack.c.l.b16 %v788
        %v1131 = vunpack.c.l.b16 %v789
        %v1132 = vunpack.c.l.b16 %v790
        %v1133 = vunpack.c.l.b16 %v791
        %v1134 = vunpack.c.l.b16 %v792
        %v1135 = vunpack.c.l.b16 %v793
        %v1136 = vunpack.c.l.b16 %v794
        %v1137 = vunpack.c.l.b16 %v795
        %v1138 = vunpack.c.l.b16 %v796
        %v1139 = vunpack.c.l.b16 %v797
        %v1140 = vunpack.c.l.b16 %v798
        %v1141 = vunpack.c.l.b16 %v799
        %v1142 = vunpack.c.l.b16 %v800
        %v1143 = vunpack.c.l.b16 %v801
        %v1144 = vunpack.c.l.b16 %v802
        %v1145 = vunpack.c.l.b16 %v803
        %v1146 = vunpack.c.l.b16 %v804
        %v1147 = vunpack.c.l.b16 %v805
        %v1148 = vunpack.c.l.b16 %v806
        %v1149 = vunpack.c.l.b16 %v807
        %v1150 = vunpack.c.l.b16 %v808
        %v1151 = vunpack.c.l.b16 %v809
        %v1152 = vunpack.c.l.b16 %v810
        %v1153 = vunpack.c.l.b16 %v811
        %v1154 = vunpack.c.l.b16 %v812
        %v1155 = vunpack.c.l.b16 %v813
        %v1156 = vunpack.c.l.b16 %v814
        %v1157 = vunpack.c.l.b16 %v815
        %v1158 = vunpack.c.l.b16 %v816
        %v1159 = vunpack.c.l.b16 %v817
        %v1160 = vunpack.c.l.b16 %v818
        %v1161 = vunpack.c.l.b16 %v819
        %v1162 = vunpack.c.l.b16 %v820
        %v1163 = vunpack.c.l.b16 %v821
        %v1164 = vunpack.c.l.b16 %v822
        %v1165 = vunpack.c.l.b16 %v823
        %v1166 = vunpack.c.l.b16 %v824
        %v1167 = vunpack.c.l.b16 %v825
        %v1168 = vunpack.c.l.b16 %v826
        %v1169 = vunpack.c.l.b16 %v827
        %v1170 = vunpack.c.l.b16 %v828
        %v1171 = vunpack.c.l.b16 %v829
        %v1172 = vunpack.c.l.b16 %v830
        %v1173 = vunpack.c.l.b16 %v831
        %v1174 = vunpack.c.l.b16 %v832
        %v1175 = vunpack.c.l.b16 %v833
        %v1176 = vunpack.c.l.b16 %v834
        %v1177 = vunpack.c.l.b16 %v835
        %v1178 = vunpack.c.l.b16 %v836
        %v1179 = vunpack.c.l.b16 %v837
        %v1180 = vunpack.c.l.b16 %v838
        %v1181 = vunpack.c.l.b16 %v839
        %v1182 = vunpack.c.l.b16 %v840
        %v1183 = vunpack.c.l.b16 %v841
        %v1184 = vunpack.c.l.b16 %v842
        %v1185 = vunpack.c.l.b16 %v843
        %v1186 = vunpack.c.l.b16 %v844
        %v1187 = vunpack.c.l.b16 %v845
        %v1188 = vunpack.c.l.b16 %v846
        %v1189 = vunpack.c.l.b16 %v847
        %v1190 = vunpack.c.l.b16 %v848
        %v1191 = vunpack.c.l.b16 %v849
        %v1192 = vunpack.c.l.b16 %v850
        %v1193 = vunpack.c.l.b16 %v851
        %v1194 = vunpack.c.l.b16 %v852
        %v1195 = vunpack.c.l.b16 %v853
        %v1196 = vunpack.c.l.b16 %v854
        %v1197 = vunpack.c.l.b16 %v855
        %v1198 = vunpack.c.l.b16 %v856
        %v1199 = vunpack.c.l.b16 %v857
        %v1200 = vunpack.c.l.b16 %v858
        %v1201 = vunpack.c.l.b16 %v859
        %v1202 = vunpack.c.l.b16 %v860
        %v1203 = vunpack.c.l.b16 %v861
        %v1204 = vunpack.c.l.b16 %v862
        %v1205 = vunpack.c.l.b16 %v863
        %v1206 = vunpack.c.l.b16 %v864
        %v1207 = vunpack.c.l.b16 %v865
        %v1208 = vunpack.c.l.b16 %v866
        %v1209 = vunpack.c.l.b16 %v867
        %v1210 = vunpack.c.l.b16 %v868
        %v1211 = vpack.c.b16 %v1068, %v1067
        %v1212 = vpack.c.b16 %v1070, %v1069
        %v1213 = vpack.c.b16 %v1072, %v1071
        %v1214 = vpack.c.b16 %v1074, %v1073
        %v1215 = vpack.c.b16 %v1076, %v1075
        %v1216 = vpack.c.b16 %v1078, %v1077
        %v1217 = vpack.c.b16 %v1080, %v1079
        %v1218 = vpack.c.b16 %v1082, %v1081
        %v1219 = vpack.c.b16 %v1084, %v1083
        %v1220 = vpack.c.b16 %v1086, %v1085
        %v1221 = vpack.c.b16 %v1088, %v1087
        %v1222 = vpack.c.b16 %v1090, %v1089
        %v1223 = vpack.c.b16 %v1092, %v1091
        %v1224 = vpack.c.b16 %v1094, %v1093
        %v1225 = vpack.c.b16 %v1096, %v1095
        %v1226 = vpack.c.b16 %v1098, %v1097
        %v1227 = vpack.c.b16 %v1100, %v1099
        %v1228 = vpack.c.b16 %v1102, %v1101
        %v1229 = vpack.c.b16 %v1104, %v1103
        %v1230 = vpack.c.b16 %v1106, %v1105
        %v1231 = vpack.c.b16 %v1108, %v1107
        %v1232 = vpack.c.b16 %v1110, %v1109
        %v1233 = vpack.c.b16 %v1112, %v1111
        %v1234 = vpack.c.b16 %v1114, %v1113
        %v1235 = vpack.c.b16 %v1116, %v1115
        %v1236 = vpack.c.b16 %v1118, %v1117
        %v1237 = vpack.c.b16 %v1120, %v1119
        %v1238 = vpack.c.b16 %v1122, %v1121
        %v1239 = vpack.c.b16 %v1124, %v1123
        %v1240 = vpack.c.b16 %v1126, %v1125
        %v1241 = vpack.c.b16 %v1128, %v1127
        %v1242 = vpack.c.b16 %v1130, %v1129
        %v1243 = vpack.c.b16 %v1132, %v1131
        %v1244 = vpack.c.b16 %v1134, %v1133
        %v1245 = vpack.c.b16 %v1136, %v1135
        %v1246 = vpack.c.b16 %v1138, %v1137
        %v1247 = vpack.c.b16 %v1140, %v1139
        %v1248 = vpack.c.b16 %v1142, %v1141
        %v1249 = vpack.c.b16 %v1144, %v1143
        %v1250 = vpack.c.b16 %v1146, %v1145
        %v1251 = vpack.c.b16 %v1148, %v1147
        %v1252 = vpack.c.b16 %v1150, %v1149
        %v1253 = vpack.c.b16 %v1152, %v1151
        %v1254 = vpack.c.b16 %v1154, %v1153
        %v1255 = vpack.c.b16 %v1156, %v1155
        %v1256 = vpack.c.b16 %v1158, %v1157
        %v1257 = vpack.c.b16 %v1160, %v1159
        %v1258 = vpack.c.b16 %v1162, %v1161
        %v1259 = vpack.c.b16 %v1164, %v1163
        %v1260 = vpack.c.b16 %v1166, %v1165
        %v1261 = vpack.c.b16 %v1168, %v1167
        %v1262 = vpack.c.b16 %v1170, %v1169
        %v1263 = vpack.c.b16 %v1172, %v1171
        %v1264 = vpack.c.b16 %v1174, %v1173
        %v1265 = vpack.c.b16 %v1176, %v1175
        %v1266 = vpack.c.b16 %v1178, %v1177
        %v1267 = vpack.c.b16 %v1180, %v1179
        %v1268 = vpack.c.b16 %v1182, %v1181
        %v1269 = vpack.c.b16 %v1184, %v1183
        %v1270 = vpack.c.b16 %v1186, %v1185
        %v1271 = vpack.c.b16 %v1188, %v1187
        %v1272 = vpack.c.b16 %v1190, %v1189
        %v1273 = vpack.c.b16 %v1192, %v1191
        %v1274 = vpack.c.b16 %v1194, %v1193
        %v1275 = vpack.c.b16 %v1196, %v1195
        %v1276 = vpack.c.b16 %v1198, %v1197
        %v1277 = vpack.c.b16 %v1200, %v1199
        %v1278 = vpack.c.b16 %v1202, %v1201
        %v1279 = vpack.c.b16 %v1204, %v1203
        %v1280 = vpack.c.b16 %v1206, %v1205
        %v1281 = vpack.c.b16 %v1208, %v1207
        %v1282 = vpack.c.b16 %v1210, %v1209
        %1355 = vmatprep.subr.bf16.mxu0 0
        %1356 = vmatpush1.bf16.msra.mxu0 %v1211
        %1357 = vmatprep.subr.bf16.mxu0 0
        %1358 = vmatpush1.bf16.msra.mxu0 %v1212
        %1359 = vmatprep.subr.bf16.mxu0 0
        %1360 = vmatpush1.bf16.msra.mxu0 %v1213
        %1361 = vmatprep.subr.bf16.mxu0 0
        %1362 = vmatpush1.bf16.msra.mxu0 %v1214
        %1363 = vmatprep.subr.bf16.mxu0 0
        %1364 = vmatpush1.bf16.msra.mxu0 %v1215
        %1365 = vmatprep.subr.bf16.mxu0 0
        %1366 = vmatpush1.bf16.msra.mxu0 %v1216
        %1367 = vmatprep.subr.bf16.mxu0 0
        %1368 = vmatpush1.bf16.msra.mxu0 %v1217
        %1369 = vmatprep.subr.bf16.mxu0 0
        %1370 = vmatpush1.bf16.msra.mxu0 %v1218
        %1371 = vmatprep.subr.bf16.mxu0 0
        %1372 = vmatpush1.bf16.msra.mxu0 %v1219
        %1373 = vmatprep.subr.bf16.mxu0 0
        %1374 = vmatpush1.bf16.msra.mxu0 %v1220
        %1375 = vmatprep.subr.bf16.mxu0 0
        %1376 = vmatpush1.bf16.msra.mxu0 %v1221
        %1377 = vmatprep.subr.bf16.mxu0 0
        %1378 = vmatpush1.bf16.msra.mxu0 %v1222
        %1379 = vmatprep.subr.bf16.mxu0 0
        %1380 = vmatpush1.bf16.msra.mxu0 %v1223
        %1381 = vmatprep.subr.bf16.mxu0 0
        %1382 = vmatpush1.bf16.msra.mxu0 %v1224
        %1383 = vmatprep.subr.bf16.mxu0 0
        %1384 = vmatpush1.bf16.msra.mxu0 %v1225
        %1385 = vmatprep.subr.bf16.mxu0 0
        %1386 = vmatpush1.bf16.msra.mxu0 %v1226
        %1387 = vmatprep.mubr.bf16.mxu0 %v870
        %1388 = vmatmul.mubr.bf16.gmra.mrb[0].mxu0 %v869
        %v1389 = vpop.f32.mrb[0].mxu0
        %v1390 = vadd.f32 0.0, %v1389
        %v1391 = vpop.f32.mrb[0].mxu0
        %v1392 = vpop.f32.mrb[0].mxu0
        %v1393 = vadd.f32 0.0, %v1392
        %v1394 = vpop.f32.mrb[0].mxu0
        %1395 = vmatprep.mubr.bf16.mxu0 %v879
        %1396 = vmatmul.mubr.bf16.gmra.mrb[0].mxu0 %v878
        %v1397 = vpop.f32.mrb[0].mxu0
        %v1398 = vadd.f32 0.0, %v1397
        %v1399 = vpop.f32.mrb[0].mxu0
        %v1400 = vpop.f32.mrb[0].mxu0
        %v1401 = vadd.f32 0.0, %v1400
        %v1402 = vpop.f32.mrb[0].mxu0
        %1403 = vmatprep.mubr.bf16.mxu0 %v888
        %1404 = vmatmul.mubr.bf16.gmra.mrb[0].mxu0 %v887
        %v1405 = vpop.f32.mrb[0].mxu0
        %v1406 = vadd.f32 0.0, %v1405
        %v1407 = vpop.f32.mrb[0].mxu0
        %v1408 = vpop.f32.mrb[0].mxu0
        %v1409 = vadd.f32 0.0, %v1408
        %v1410 = vpop.f32.mrb[0].mxu0
        %1411 = vdwg.mxu0
        %1412 = vmatprep.subr.bf16.mxu0 0
        %1413 = vmatpush1.bf16.msra.mxu0 %v1227
        %1414 = vmatprep.subr.bf16.mxu0 0
        %1415 = vmatpush1.bf16.msra.mxu0 %v1228
        %1416 = vmatprep.subr.bf16.mxu0 0
        %1417 = vmatpush1.bf16.msra.mxu0 %v1229
        %1418 = vmatprep.subr.bf16.mxu0 0
        %1419 = vmatpush1.bf16.msra.mxu0 %v1230
        %1420 = vmatprep.subr.bf16.mxu0 0
        %1421 = vmatpush1.bf16.msra.mxu0 %v1231
        %1422 = vmatprep.subr.bf16.mxu0 0
        %1423 = vmatpush1.bf16.msra.mxu0 %v1232
        %1424 = vmatprep.subr.bf16.mxu0 0
        %1425 = vmatpush1.bf16.msra.mxu0 %v1233
        %1426 = vmatprep.subr.bf16.mxu0 0
        %1427 = vmatpush1.bf16.msra.mxu0 %v1234
        %1428 = vmatprep.subr.bf16.mxu0 0
        %1429 = vmatpush1.bf16.msra.mxu0 %v1235
        %1430 = vmatprep.subr.bf16.mxu0 0
        %1431 = vmatpush1.bf16.msra.mxu0 %v1236
        %1432 = vmatprep.subr.bf16.mxu0 0
        %1433 = vmatpush1.bf16.msra.mxu0 %v1237
        %1434 = vmatprep.subr.bf16.mxu0 0
        %1435 = vmatpush1.bf16.msra.mxu0 %v1238
        %1436 = vmatprep.subr.bf16.mxu0 0
        %1437 = vmatpush1.bf16.msra.mxu0 %v1239
        %1438 = vmatprep.subr.bf16.mxu0 0
        %1439 = vmatpush1.bf16.msra.mxu0 %v1240
        %1440 = vmatprep.subr.bf16.mxu0 0
        %1441 = vmatpush1.bf16.msra.mxu0 %v1241
        %1442 = vmatprep.subr.bf16.mxu0 0
        %1443 = vmatpush1.bf16.msra.mxu0 %v1242
        %1444 = vmatprep.mubr.bf16.mxu0 %v872
        %1445 = vmatmul.mubr.bf16.gmra.mrb[0].mxu0 %v871
        %v1446 = vpop.f32.mrb[0].mxu0
        %v1447 = vadd.f32 %v1390, %v1446
        %v1448 = vpop.f32.mrb[0].mxu0
        %v1449 = vpop.f32.mrb[0].mxu0
        %v1450 = vadd.f32 %v1393, %v1449
        %v1451 = vpop.f32.mrb[0].mxu0
        %1452 = vmatprep.mubr.bf16.mxu0 %v881
        %1453 = vmatmul.mubr.bf16.gmra.mrb[0].mxu0 %v880
        %v1454 = vpop.f32.mrb[0].mxu0
        %v1455 = vadd.f32 %v1398, %v1454
        %v1456 = vpop.f32.mrb[0].mxu0
        %v1457 = vpop.f32.mrb[0].mxu0
        %v1458 = vadd.f32 %v1401, %v1457
        %v1459 = vpop.f32.mrb[0].mxu0
        %1460 = vmatprep.mubr.bf16.mxu0 %v890
        %1461 = vmatmul.mubr.bf16.gmra.mrb[0].mxu0 %v889
        %v1462 = vpop.f32.mrb[0].mxu0
        %v1463 = vadd.f32 %v1406, %v1462
        %v1464 = vpop.f32.mrb[0].mxu0
        %v1465 = vpop.f32.mrb[0].mxu0
        %v1466 = vadd.f32 %v1409, %v1465
        %v1467 = vpop.f32.mrb[0].mxu0
        %1468 = vdwg.mxu0
        %1469 = vmatprep.subr.bf16.mxu0 0
        %1470 = vmatpush1.bf16.msra.mxu0 %v1243
        %1471 = vmatprep.subr.bf16.mxu0 0
        %1472 = vmatpush1.bf16.msra.mxu0 %v1244
        %1473 = vmatprep.subr.bf16.mxu0 0
        %1474 = vmatpush1.bf16.msra.mxu0 %v1245
        %1475 = vmatprep.subr.bf16.mxu0 0
        %1476 = vmatpush1.bf16.msra.mxu0 %v1246
        %1477 = vmatprep.subr.bf16.mxu0 0
        %1478 = vmatpush1.bf16.msra.mxu0 %v1247
        %1479 = vmatprep.subr.bf16.mxu0 0
        %1480 = vmatpush1.bf16.msra.mxu0 %v1248
        %1481 = vmatprep.subr.bf16.mxu0 0
        %1482 = vmatpush1.bf16.msra.mxu0 %v1249
        %1483 = vmatprep.subr.bf16.mxu0 0
        %1484 = vmatpush1.bf16.msra.mxu0 %v1250
        %1485 = vmatprep.subr.bf16.mxu0 0
        %1486 = vmatpush1.bf16.msra.mxu0 %v1251
        %1487 = vmatprep.subr.bf16.mxu0 0
        %1488 = vmatpush1.bf16.msra.mxu0 %v1252
        %1489 = vmatprep.subr.bf16.mxu0 0
        %1490 = vmatpush1.bf16.msra.mxu0 %v1253
        %1491 = vmatprep.subr.bf16.mxu0 0
        %1492 = vmatpush1.bf16.msra.mxu0 %v1254
        %1493 = vmatprep.subr.bf16.mxu0 0
        %1494 = vmatpush1.bf16.msra.mxu0 %v1255
        %1495 = vmatprep.subr.bf16.mxu0 0
        %1496 = vmatpush1.bf16.msra.mxu0 %v1256
        %1497 = vmatprep.subr.bf16.mxu0 0
        %1498 = vmatpush1.bf16.msra.mxu0 %v1257
        %1499 = vmatprep.subr.bf16.mxu0 0
        %1500 = vmatpush1.bf16.msra.mxu0 %v1258
        %1501 = vmatprep.mubr.bf16.mxu0 %v874
        %1502 = vmatmul.mubr.bf16.gmra.mrb[0].mxu0 %v873
        %v1503 = vpop.f32.mrb[0].mxu0
        %v1504 = vadd.f32 %v1447, %v1503
        %v1505 = vpop.f32.mrb[0].mxu0
        %v1506 = vpop.f32.mrb[0].mxu0
        %v1507 = vadd.f32 %v1450, %v1506
        %v1508 = vpop.f32.mrb[0].mxu0
        %1509 = vmatprep.mubr.bf16.mxu0 %v883
        %1510 = vmatmul.mubr.bf16.gmra.mrb[0].mxu0 %v882
        %v1511 = vpop.f32.mrb[0].mxu0
        %v1512 = vadd.f32 %v1455, %v1511
        %v1513 = vpop.f32.mrb[0].mxu0
        %v1514 = vpop.f32.mrb[0].mxu0
        %v1515 = vadd.f32 %v1458, %v1514
        %v1516 = vpop.f32.mrb[0].mxu0
        %1517 = vmatprep.mubr.bf16.mxu0 %v892
        %1518 = vmatmul.mubr.bf16.gmra.mrb[0].mxu0 %v891
        %v1519 = vpop.f32.mrb[0].mxu0
        %v1520 = vadd.f32 %v1463, %v1519
        %v1521 = vpop.f32.mrb[0].mxu0
        %v1522 = vpop.f32.mrb[0].mxu0
        %v1523 = vadd.f32 %v1466, %v1522
        %v1524 = vpop.f32.mrb[0].mxu0
        %1525 = vdwg.mxu0
        %1526 = vmatprep.subr.bf16.mxu0 0
        %1527 = vmatpush1.bf16.msra.mxu0 %v1259
        %1528 = vmatprep.subr.bf16.mxu0 0
        %1529 = vmatpush1.bf16.msra.mxu0 %v1260
        %1530 = vmatprep.subr.bf16.mxu0 0
        %1531 = vmatpush1.bf16.msra.mxu0 %v1261
        %1532 = vmatprep.subr.bf16.mxu0 0
        %1533 = vmatpush1.bf16.msra.mxu0 %v1262
        %1534 = vmatprep.subr.bf16.mxu0 0
        %1535 = vmatpush1.bf16.msra.mxu0 %v1263
        %1536 = vmatprep.subr.bf16.mxu0 0
        %1537 = vmatpush1.bf16.msra.mxu0 %v1264
        %1538 = vmatprep.subr.bf16.mxu0 0
        %1539 = vmatpush1.bf16.msra.mxu0 %v1265
        %1540 = vmatprep.subr.bf16.mxu0 0
        %1541 = vmatpush1.bf16.msra.mxu0 %v1266
        %1542 = vmatprep.subr.bf16.mxu0 0
        %1543 = vmatpush1.bf16.msra.mxu0 %v1267
        %1544 = vmatprep.subr.bf16.mxu0 0
        %1545 = vmatpush1.bf16.msra.mxu0 %v1268
        %1546 = vmatprep.subr.bf16.mxu0 0
        %1547 = vmatpush1.bf16.msra.mxu0 %v1269
        %1548 = vmatprep.subr.bf16.mxu0 0
        %1549 = vmatpush1.bf16.msra.mxu0 %v1270
        %1550 = vmatprep.subr.bf16.mxu0 0
        %1551 = vmatpush1.bf16.msra.mxu0 %v1271
        %1552 = vmatprep.subr.bf16.mxu0 0
        %1553 = vmatpush1.bf16.msra.mxu0 %v1272
        %1554 = vmatprep.subr.bf16.mxu0 0
        %1555 = vmatpush1.bf16.msra.mxu0 %v1273
        %1556 = vmatprep.subr.bf16.mxu0 0
        %1557 = vmatpush1.bf16.msra.mxu0 %v1274
        %1558 = vmatprep.mubr.bf16.mxu0 %v876
        %1559 = vmatmul.mubr.bf16.gmra.mrb[0].mxu0 %v875
        %v1560 = vpop.f32.mrb[0].mxu0
        %v1561 = vadd.f32 %v1504, %v1560
        %v1562 = vpop.f32.mrb[0].mxu0
        %v1563 = vpop.f32.mrb[0].mxu0
        %v1564 = vadd.f32 %v1507, %v1563
        %v1565 = vpop.f32.mrb[0].mxu0
        %1566 = vmatprep.mubr.bf16.mxu0 %v885
        %1567 = vmatmul.mubr.bf16.gmra.mrb[0].mxu0 %v884
        %v1568 = vpop.f32.mrb[0].mxu0
        %v1569 = vadd.f32 %v1512, %v1568
        %v1570 = vpop.f32.mrb[0].mxu0
        %v1571 = vpop.f32.mrb[0].mxu0
        %v1572 = vadd.f32 %v1515, %v1571
        %v1573 = vpop.f32.mrb[0].mxu0
        %1574 = vmatprep.mubr.bf16.mxu0 %v894
        %1575 = vmatmul.mubr.bf16.gmra.mrb[0].mxu0 %v893
        %v1576 = vpop.f32.mrb[0].mxu0
        %v1577 = vadd.f32 %v1520, %v1576
        %v1578 = vpop.f32.mrb[0].mxu0
        %v1579 = vpop.f32.mrb[0].mxu0
        %v1580 = vadd.f32 %v1523, %v1579
        %v1581 = vpop.f32.mrb[0].mxu0
        %1582 = vdwg.mxu0
        %1583 = vmatprep.subr.bf16.mxu0 0
        %1584 = vmatpush1.bf16.msra.mxu0 %v1275
        %1585 = vmatprep.subr.bf16.mxu0 0
        %1586 = vmatpush1.bf16.msra.mxu0 %v1276
        %1587 = vmatprep.subr.bf16.mxu0 0
        %1588 = vmatpush1.bf16.msra.mxu0 %v1277
        %1589 = vmatprep.subr.bf16.mxu0 0
        %1590 = vmatpush1.bf16.msra.mxu0 %v1278
        %1591 = vmatprep.subr.bf16.mxu0 0
        %1592 = vmatpush1.bf16.msra.mxu0 %v1279
        %1593 = vmatprep.subr.bf16.mxu0 0
        %1594 = vmatpush1.bf16.msra.mxu0 %v1280
        %1595 = vmatprep.subr.bf16.mxu0 0
        %1596 = vmatpush1.bf16.msra.mxu0 %v1281
        %1597 = vmatprep.subr.bf16.mxu0 0
        %1598 = vmatpush1.bf16.msra.mxu0 %v1282
        %1599 = vmatprep.subr.bf16.mxu0 0
        %1600 = vmatpush1.bf16.msra.mxu0 0
        %1601 = vmatprep.subr.bf16.mxu0 0
        %1602 = vmatpush1.bf16.msra.mxu0 0
        %1603 = vmatprep.subr.bf16.mxu0 0
        %1604 = vmatpush1.bf16.msra.mxu0 0
        %1605 = vmatprep.subr.bf16.mxu0 0
        %1606 = vmatpush1.bf16.msra.mxu0 0
        %1607 = vmatprep.subr.bf16.mxu0 0
        %1608 = vmatpush1.bf16.msra.mxu0 0
        %1609 = vmatprep.subr.bf16.mxu0 0
        %1610 = vmatpush1.bf16.msra.mxu0 0
        %1611 = vmatprep.subr.bf16.mxu0 0
        %1612 = vmatpush1.bf16.msra.mxu0 0
        %1613 = vmatprep.subr.bf16.mxu0 0
        %1614 = vmatpush1.bf16.msra.mxu0 0
        %1615 = vmatprep.mubr.bf16.mxu0 0
        %1616 = vmatmul.mubr.bf16.gmra.mrb[0].mxu0 %v877
        %v1617 = vpop.f32.mrb[0].mxu0
        %v1618 = vadd.f32 %v1561, %v1617
        %v1619 = vpop.f32.mrb[0].mxu0
        %v1620 = vpop.f32.mrb[0].mxu0
        %v1621 = vadd.f32 %v1564, %v1620
        %v1622 = vpop.f32.mrb[0].mxu0
        %1623 = vmatprep.mubr.bf16.mxu0 0
        %1624 = vmatmul.mubr.bf16.gmra.mrb[0].mxu0 %v886
        %v1625 = vpop.f32.mrb[0].mxu0
        %v1626 = vadd.f32 %v1569, %v1625
        %v1627 = vpop.f32.mrb[0].mxu0
        %v1628 = vpop.f32.mrb[0].mxu0
        %v1629 = vadd.f32 %v1572, %v1628
        %v1630 = vpop.f32.mrb[0].mxu0
        %1631 = vmatprep.mubr.bf16.mxu0 0
        %1632 = vmatmul.mubr.bf16.gmra.mrb[0].mxu0 %v895
        %v1633 = vpop.f32.mrb[0].mxu0
        %v1634 = vadd.f32 %v1577, %v1633
        %v1635 = vpop.f32.mrb[0].mxu0
        %v1636 = vpop.f32.mrb[0].mxu0
        %v1637 = vadd.f32 %v1580, %v1636
        %v1638 = vpop.f32.mrb[0].mxu0
        %1639 = vdwg.mxu0
        %v1640 = vld [vmem:[#allocation8] sm:$0x1]
        %v1642 = vlaneseq
        %v1643 = vshrl.u32 %v1642, 7
        %v1644 = vsub.s32 0, %v1643
        %v1645 = vrot.slane %v1640, %v1644
        %v1647 = vmul.f32 %v1618, %v1645
        %v1648 = vmul.f32 %v1621, %v1645
        %v1649 = vmul.f32 %v1626, %v1645
        %v1650 = vmul.f32 %v1629, %v1645
        %v1651 = vmul.f32 %v1634, %v1645
        %v1652 = vmul.f32 %v1637, %v1645
        %v1653 = vld [vmem:[#allocation9] sm:$0x1]
        %v1655 = vlaneseq
        %v1656 = vshrl.u32 %v1655, 7
        %v1657 = vsub.s32 0, %v1656
        %v1658 = vrot.slane %v1653, %v1657
        %v1660 = vadd.f32 %v1647, %v1658
        %v1661 = vadd.f32 %v1648, %v1658
        %v1662 = vadd.f32 %v1649, %v1658
        %v1663 = vadd.f32 %v1650, %v1658
        %v1664 = vadd.f32 %v1651, %v1658
        %v1665 = vadd.f32 %v1652, %v1658
        %v1666 = vmax.f32 %v1660, 0.0
        %v1667 = vmax.f32 %v1661, 0.0
        %v1668 = vmax.f32 %v1662, 0.0
        %v1669 = vmax.f32 %v1663, 0.0
        %v1670 = vmax.f32 %v1664, 0.0
        %v1671 = vmax.f32 %v1665, 0.0
        %v1672 = vpack.c.bf16 %v1666, %v1666
        %v1673 = vpack.c.bf16 %v1667, %v1667
        %v1674 = vpack.c.bf16 %v1668, %v1668
        %v1675 = vpack.c.bf16 %v1669, %v1669
        %v1676 = vpack.c.bf16 %v1670, %v1670
        %v1677 = vpack.c.bf16 %v1671, %v1671
        %v1679 = vshrl.u32 %v1672, 16
        %v1681 = vrot.slane %v1679, 7
        %v1682 = vshll.u32 %v1672, 16
        %v1684 = vor.u32 %v1681, %v1682
        %v1686 = vshrl.u32 %v1673, 16
        %v1688 = vrot.slane %v1686, 7
        %v1689 = vshll.u32 %v1673, 16
        %v1691 = vor.u32 %v1688, %v1689
        %v1693 = vshrl.u32 %v1674, 16
        %v1695 = vrot.slane %v1693, 7
        %v1696 = vshll.u32 %v1674, 16
        %v1698 = vor.u32 %v1695, %v1696
        %v1700 = vshrl.u32 %v1675, 16
        %v1702 = vrot.slane %v1700, 7
        %v1703 = vshll.u32 %v1675, 16
        %v1705 = vor.u32 %v1702, %v1703
        %v1707 = vshrl.u32 %v1676, 16
        %v1709 = vrot.slane %v1707, 7
        %v1710 = vshll.u32 %v1676, 16
        %v1712 = vor.u32 %v1709, %v1710
        %v1714 = vshrl.u32 %v1677, 16
        %v1716 = vrot.slane %v1714, 7
        %v1717 = vshll.u32 %v1677, 16
        %v1719 = vor.u32 %v1716, %v1717
        %vm1726 = vcmask 1040384
        %vm1727 = vsmask.f32 256
        %vm1728 = vmand %vm1726, %vm1727
        %v1729 = vsel %vm1728, 0, %v1684
        %v1730 = vsel %vm1728, 0, %v1691
        %v1731 = vsel %vm1728, 0, %v1698
        %v1732 = vsel %vm1728, 0, %v1705
        %v1733 = vsel %vm1728, 0, %v1712
        %v1734 = vsel %vm1728, 0, %v1719
        %vm1735 = vcmask 1044480
        %vm1736 = vsmask.f32 4352
        %vm1737 = vmand %vm1735, %vm1736
        %v1738 = vsel %vm1737, %v1729, 0
        %v1739 = vsel %vm1737, %v1730, 0
        %v1740 = vsel %vm1737, %v1731, 0
        %v1741 = vsel %vm1737, %v1732, 0
        %v1742 = vsel %vm1737, %v1733, 0
        %v1743 = vsel %vm1737, %v1734, 0
        %v1750 = vunpack.c.l.b16 %v1738
        %v1751 = vunpack.c.h.b16 %v1738
        %v1752 = vunpack.c.l.b16 %v1739
        %v1753 = vunpack.c.h.b16 %v1739
        %v1754 = vunpack.c.l.b16 %v1740
        %v1755 = vunpack.c.h.b16 %v1740
        %v1756 = vunpack.c.l.b16 %v1741
        %v1757 = vunpack.c.h.b16 %v1741
        %v1758 = vunpack.c.l.b16 %v1742
        %v1759 = vunpack.c.h.b16 %v1742
        %v1760 = vunpack.c.l.b16 %v1743
        %v1761 = vunpack.c.h.b16 %v1743
        %v1762 = vpack.c.b16 %v1750, %v1750
        %v1763 = vpack.c.b16 %v1751, %v1751
        %v1764 = vpack.c.b16 %v1752, %v1752
        %v1765 = vpack.c.b16 %v1753, %v1753
        %v1766 = vpack.c.b16 %v1754, %v1754
        %v1767 = vpack.c.b16 %v1755, %v1755
        %v1768 = vpack.c.b16 %v1756, %v1756
        %v1769 = vpack.c.b16 %v1757, %v1757
        %v1770 = vpack.c.b16 %v1758, %v1758
        %v1771 = vpack.c.b16 %v1759, %v1759
        %v1772 = vpack.c.b16 %v1760, %v1760
        %v1773 = vpack.c.b16 %v1761, %v1761
        %1786 = vst [vmem:[#allocation2] sm:$0xf] %v1762
        %1787 = vst [vmem:[#allocation2 + $0x4] sm:$0x1] %v1763
        %1788 = vst [vmem:[#allocation2 + $0x8] sm:$0xf] %v1764
        %1789 = vst [vmem:[#allocation2 + $0xc] sm:$0x1] %v1765
        %1790 = vst [vmem:[#allocation2 + $0x10] sm:$0xf] %v1766
        %1791 = vst [vmem:[#allocation2 + $0x14] sm:$0x1] %v1767
        %1792 = vst [vmem:[#allocation2 + $0x18] sm:$0xf] %v1768
        %1793 = vst [vmem:[#allocation2 + $0x1c] sm:$0x1] %v1769
        %1794 = vst [vmem:[#allocation2 + $0x20] sm:$0xf] %v1770
        %1795 = vst [vmem:[#allocation2 + $0x24] sm:$0x1] %v1771
        %1796 = vst [vmem:[#allocation2 + $0x28] sm:$0xf] %v1772
        %1797 = vst [vmem:[#allocation2 + $0x2c] sm:$0x1] %v1773
        %p1798 = scmp.eq.s32.totalorder %s37, 0
        // Predicated region
        $region101: #{tpu_custom_call.1} parent=59 // pred_check
          %p1799 = pneg %p1798
        $region102: #{tpu_custom_call.1} parent=59 // pred_check_branch
          %1801 = sbr.rel (%p1799) target = $region104
        $region103: #{tpu_custom_call.1} parent=59 // pred_region
          %1802 = vst [vmem:[#allocation2] sm:$0xf] 0
          %1803 = vst [vmem:[#allocation2 + $0x4] sm:$0x1] 0
        $region104: #{tpu_custom_call.1} parent=59 // pred_fallthru
          _
        %p1804 = scmp.eq.s32.totalorder %s37, 1
        // Predicated region
        $region105: #{tpu_custom_call.1} parent=59 // pred_check
          %p1805 = pneg %p1804
        $region106: #{tpu_custom_call.1} parent=59 // pred_check_branch
          %1807 = sbr.rel (%p1805) target = $region108
        $region107: #{tpu_custom_call.1} parent=59 // pred_region
          %s1808 = scalar_lea.vmem [#allocation2], 40
          %1809 = vst [vmem:[%s1808] sm:$0xf] 0
          %1810 = vst [vmem:[%s1808 + $0x4] sm:$0x1] 0
        $region108: #{tpu_custom_call.1} parent=59 // pred_fallthru
          _
        %v1811 = vld [vmem:[#allocation2] sm:$0xf]
        %v1812 = vld [vmem:[#allocation2 + $0x4] sm:$0x1]
        %v1813 = vld [vmem:[#allocation2 + $0x8] sm:$0xf]
        %v1814 = vld [vmem:[#allocation2 + $0xc] sm:$0x1]
        %v1815 = vld [vmem:[#allocation2 + $0x10] sm:$0xf]
        %v1816 = vld [vmem:[#allocation2 + $0x14] sm:$0x1]
        %v1817 = vld [vmem:[#allocation2 + $0x18] sm:$0xf]
        %v1818 = vld [vmem:[#allocation2 + $0x1c] sm:$0x1]
        %s1819 = scalar_lea.vmem [#allocation2], 8
        %v1820 = vld [vmem:[%s1819] sm:$0xf]
        %v1821 = vld [vmem:[%s1819 + $0x4] sm:$0x1]
        %v1822 = vld [vmem:[%s1819 + $0x8] sm:$0xf]
        %v1823 = vld [vmem:[%s1819 + $0xc] sm:$0x1]
        %v1824 = vld [vmem:[%s1819 + $0x10] sm:$0xf]
        %v1825 = vld [vmem:[%s1819 + $0x14] sm:$0x1]
        %v1826 = vld [vmem:[%s1819 + $0x18] sm:$0xf]
        %v1827 = vld [vmem:[%s1819 + $0x1c] sm:$0x1]
        %s1828 = scalar_lea.vmem [#allocation2], 16
        %v1829 = vld [vmem:[%s1828] sm:$0xf]
        %v1830 = vld [vmem:[%s1828 + $0x4] sm:$0x1]
        %v1831 = vld [vmem:[%s1828 + $0x8] sm:$0xf]
        %v1832 = vld [vmem:[%s1828 + $0xc] sm:$0x1]
        %v1833 = vld [vmem:[%s1828 + $0x10] sm:$0xf]
        %v1834 = vld [vmem:[%s1828 + $0x14] sm:$0x1]
        %v1835 = vld [vmem:[%s1828 + $0x18] sm:$0xf]
        %v1836 = vld [vmem:[%s1828 + $0x1c] sm:$0x1]
        %v1845 = vunpack.c.l.b16 %v1811
        %v1846 = vunpack.c.l.b16 %v1812
        %v1847 = vunpack.c.l.b16 %v1813
        %v1848 = vunpack.c.l.b16 %v1814
        %v1849 = vunpack.c.l.b16 %v1815
        %v1850 = vunpack.c.l.b16 %v1816
        %v1851 = vunpack.c.l.b16 %v1817
        %v1852 = vunpack.c.l.b16 %v1818
        %v1853 = vpack.c.b16 %v1846, %v1845
        %v1854 = vpack.c.b16 %v1848, %v1847
        %v1855 = vpack.c.b16 %v1850, %v1849
        %v1856 = vpack.c.b16 %v1852, %v1851
        %v1858 = vshrl.u32 %v1853, 16
        %v1860 = vshll.u32 %v1853, 16
        %v1862 = vrot.slane %v1860, 1
        %v1863 = vor.u32 %v1858, %v1862
        %v1865 = vshrl.u32 %v1854, 16
        %v1867 = vshll.u32 %v1854, 16
        %v1869 = vrot.slane %v1867, 1
        %v1870 = vor.u32 %v1865, %v1869
        %v1872 = vshrl.u32 %v1855, 16
        %v1874 = vshll.u32 %v1855, 16
        %v1876 = vrot.slane %v1874, 1
        %v1877 = vor.u32 %v1872, %v1876
        %v1879 = vshrl.u32 %v1856, 16
        %v1881 = vshll.u32 %v1856, 16
        %v1883 = vrot.slane %v1881, 1
        %v1884 = vor.u32 %v1879, %v1883
        %v1885 = vrot.slane %v1853, 1
        %v1886 = vrot.slane %v1854, 1
        %v1887 = vrot.slane %v1855, 1
        %v1888 = vrot.slane %v1856, 1
        %v1897 = vunpack.c.l.b16 %v1820
        %v1898 = vunpack.c.l.b16 %v1821
        %v1899 = vunpack.c.l.b16 %v1822
        %v1900 = vunpack.c.l.b16 %v1823
        %v1901 = vunpack.c.l.b16 %v1824
        %v1902 = vunpack.c.l.b16 %v1825
        %v1903 = vunpack.c.l.b16 %v1826
        %v1904 = vunpack.c.l.b16 %v1827
        %v1905 = vpack.c.b16 %v1898, %v1897
        %v1906 = vpack.c.b16 %v1900, %v1899
        %v1907 = vpack.c.b16 %v1902, %v1901
        %v1908 = vpack.c.b16 %v1904, %v1903
        %v1910 = vshrl.u32 %v1905, 16
        %v1912 = vshll.u32 %v1905, 16
        %v1914 = vrot.slane %v1912, 1
        %v1915 = vor.u32 %v1910, %v1914
        %v1917 = vshrl.u32 %v1906, 16
        %v1919 = vshll.u32 %v1906, 16
        %v1921 = vrot.slane %v1919, 1
        %v1922 = vor.u32 %v1917, %v1921
        %v1924 = vshrl.u32 %v1907, 16
        %v1926 = vshll.u32 %v1907, 16
        %v1928 = vrot.slane %v1926, 1
        %v1929 = vor.u32 %v1924, %v1928
        %v1931 = vshrl.u32 %v1908, 16
        %v1933 = vshll.u32 %v1908, 16
        %v1935 = vrot.slane %v1933, 1
        %v1936 = vor.u32 %v1931, %v1935
        %v1937 = vrot.slane %v1905, 1
        %v1938 = vrot.slane %v1906, 1
        %v1939 = vrot.slane %v1907, 1
        %v1940 = vrot.slane %v1908, 1
        %v1949 = vunpack.c.l.b16 %v1829
        %v1950 = vunpack.c.l.b16 %v1830
        %v1951 = vunpack.c.l.b16 %v1831
        %v1952 = vunpack.c.l.b16 %v1832
        %v1953 = vunpack.c.l.b16 %v1833
        %v1954 = vunpack.c.l.b16 %v1834
        %v1955 = vunpack.c.l.b16 %v1835
        %v1956 = vunpack.c.l.b16 %v1836
        %v1957 = vpack.c.b16 %v1950, %v1949
        %v1958 = vpack.c.b16 %v1952, %v1951
        %v1959 = vpack.c.b16 %v1954, %v1953
        %v1960 = vpack.c.b16 %v1956, %v1955
        %v1962 = vshrl.u32 %v1957, 16
        %v1964 = vshll.u32 %v1957, 16
        %v1966 = vrot.slane %v1964, 1
        %v1967 = vor.u32 %v1962, %v1966
        %v1969 = vshrl.u32 %v1958, 16
        %v1971 = vshll.u32 %v1958, 16
        %v1973 = vrot.slane %v1971, 1
        %v1974 = vor.u32 %v1969, %v1973
        %v1976 = vshrl.u32 %v1959, 16
        %v1978 = vshll.u32 %v1959, 16
        %v1980 = vrot.slane %v1978, 1
        %v1981 = vor.u32 %v1976, %v1980
        %v1983 = vshrl.u32 %v1960, 16
        %v1985 = vshll.u32 %v1960, 16
        %v1987 = vrot.slane %v1985, 1
        %v1988 = vor.u32 %v1983, %v1987
        %v1989 = vrot.slane %v1957, 1
        %v1990 = vrot.slane %v1958, 1
        %v1991 = vrot.slane %v1959, 1
        %v1992 = vrot.slane %v1960, 1
        %v1993 = vunpack.c.l.b16 %v1863
        %v1994 = vunpack.c.l.b16 %v1885
        %v1995 = vunpack.c.l.b16 %v1915
        %v1996 = vunpack.c.l.b16 %v1937
        %v1997 = vunpack.c.l.b16 %v1967
        %v1998 = vunpack.c.l.b16 %v1989
        %v1999 = vunpack.c.l.b16 %v1870
        %v2000 = vunpack.c.l.b16 %v1886
        %v2001 = vunpack.c.l.b16 %v1922
        %v2002 = vunpack.c.l.b16 %v1938
        %v2003 = vunpack.c.l.b16 %v1974
        %v2004 = vunpack.c.l.b16 %v1990
        %v2005 = vunpack.c.l.b16 %v1877
        %v2006 = vunpack.c.l.b16 %v1887
        %v2007 = vunpack.c.l.b16 %v1929
        %v2008 = vunpack.c.l.b16 %v1939
        %v2009 = vunpack.c.l.b16 %v1981
        %v2010 = vunpack.c.l.b16 %v1991
        %v2011 = vunpack.c.l.b16 %v1884
        %v2012 = vunpack.c.l.b16 %v1888
        %v2013 = vunpack.c.l.b16 %v1936
        %v2014 = vunpack.c.l.b16 %v1940
        %v2015 = vunpack.c.l.b16 %v1988
        %v2016 = vunpack.c.l.b16 %v1992
        %v2017 = vld [vmem:[#allocation11] sm:$0xf]
        %v2018 = vld [vmem:[#allocation11 + $0x4] sm:$0xf]
        %v2019 = vld [vmem:[#allocation11 + $0x8] sm:$0xf]
        %v2020 = vld [vmem:[#allocation11 + $0xc] sm:$0xf]
        %v2021 = vld [vmem:[#allocation11 + $0x10] sm:$0xf]
        %v2022 = vld [vmem:[#allocation11 + $0x14] sm:$0xf]
        %v2023 = vld [vmem:[#allocation11 + $0x18] sm:$0xf]
        %v2024 = vld [vmem:[#allocation11 + $0x1c] sm:$0xf]
        %v2025 = vld [vmem:[#allocation11 + $0x20] sm:$0xf]
        %v2026 = vld [vmem:[#allocation11 + $0x24] sm:$0xf]
        %v2027 = vld [vmem:[#allocation11 + $0x28] sm:$0xf]
        %v2028 = vld [vmem:[#allocation11 + $0x2c] sm:$0xf]
        %v2029 = vld [vmem:[#allocation11 + $0x30] sm:$0xf]
        %v2030 = vld [vmem:[#allocation11 + $0x34] sm:$0xf]
        %v2031 = vld [vmem:[#allocation11 + $0x38] sm:$0xf]
        %v2032 = vld [vmem:[#allocation11 + $0x3c] sm:$0xf]
        %v2033 = vld [vmem:[#allocation11 + $0x40] sm:$0xf]
        %v2034 = vld [vmem:[#allocation11 + $0x44] sm:$0xf]
        %v2035 = vld [vmem:[#allocation11 + $0x48] sm:$0xf]
        %v2036 = vld [vmem:[#allocation11 + $0x4c] sm:$0xf]
        %v2037 = vld [vmem:[#allocation11 + $0x50] sm:$0xf]
        %v2038 = vld [vmem:[#allocation11 + $0x54] sm:$0xf]
        %v2039 = vld [vmem:[#allocation11 + $0x58] sm:$0xf]
        %v2040 = vld [vmem:[#allocation11 + $0x5c] sm:$0xf]
        %v2041 = vld [vmem:[#allocation11 + $0x60] sm:$0xf]
        %v2042 = vld [vmem:[#allocation11 + $0x64] sm:$0xf]
        %v2043 = vld [vmem:[#allocation11 + $0x68] sm:$0xf]
        %v2044 = vld [vmem:[#allocation11 + $0x6c] sm:$0xf]
        %v2045 = vld [vmem:[#allocation11 + $0x70] sm:$0xf]
        %v2046 = vld [vmem:[#allocation11 + $0x74] sm:$0xf]
        %v2047 = vld [vmem:[#allocation11 + $0x78] sm:$0xf]
        %v2048 = vld [vmem:[#allocation11 + $0x7c] sm:$0xf]
        %v2049 = vld [vmem:[#allocation11 + $0x80] sm:$0xf]
        %v2050 = vld [vmem:[#allocation11 + $0x84] sm:$0xf]
        %v2051 = vld [vmem:[#allocation11 + $0x88] sm:$0xf]
        %v2052 = vld [vmem:[#allocation11 + $0x8c] sm:$0xf]
        %v2053 = vld [vmem:[#allocation11 + $0x90] sm:$0xf]
        %v2054 = vld [vmem:[#allocation11 + $0x94] sm:$0xf]
        %v2055 = vld [vmem:[#allocation11 + $0x98] sm:$0xf]
        %v2056 = vld [vmem:[#allocation11 + $0x9c] sm:$0xf]
        %v2057 = vld [vmem:[#allocation11 + $0xa0] sm:$0xf]
        %v2058 = vld [vmem:[#allocation11 + $0xa4] sm:$0xf]
        %v2059 = vld [vmem:[#allocation11 + $0xa8] sm:$0xf]
        %v2060 = vld [vmem:[#allocation11 + $0xac] sm:$0xf]
        %v2061 = vld [vmem:[#allocation11 + $0xb0] sm:$0xf]
        %v2062 = vld [vmem:[#allocation11 + $0xb4] sm:$0xf]
        %v2063 = vld [vmem:[#allocation11 + $0xb8] sm:$0xf]
        %v2064 = vld [vmem:[#allocation11 + $0xbc] sm:$0xf]
        %v2065 = vld [vmem:[#allocation11 + $0xc0] sm:$0xf]
        %v2066 = vld [vmem:[#allocation11 + $0xc4] sm:$0xf]
        %v2067 = vld [vmem:[#allocation11 + $0xc8] sm:$0xf]
        %v2068 = vld [vmem:[#allocation11 + $0xcc] sm:$0xf]
        %v2069 = vld [vmem:[#allocation11 + $0xd0] sm:$0xf]
        %v2070 = vld [vmem:[#allocation11 + $0xd4] sm:$0xf]
        %v2071 = vld [vmem:[#allocation11 + $0xd8] sm:$0xf]
        %v2072 = vld [vmem:[#allocation11 + $0xdc] sm:$0xf]
        %v2073 = vld [vmem:[#allocation11 + $0xe0] sm:$0xf]
        %v2074 = vld [vmem:[#allocation11 + $0xe4] sm:$0xf]
        %v2075 = vld [vmem:[#allocation11 + $0xe8] sm:$0xf]
        %v2076 = vld [vmem:[#allocation11 + $0xec] sm:$0xf]
        %v2077 = vld [vmem:[#allocation11 + $0xf0] sm:$0xf]
        %v2078 = vld [vmem:[#allocation11 + $0xf4] sm:$0xf]
        %v2079 = vld [vmem:[#allocation11 + $0xf8] sm:$0xf]
        %v2080 = vld [vmem:[#allocation11 + $0xfc] sm:$0xf]
        %v2081 = vld [vmem:[#allocation11 + $0x100] sm:$0xf]
        %v2082 = vld [vmem:[#allocation11 + $0x104] sm:$0xf]
        %v2083 = vld [vmem:[#allocation11 + $0x108] sm:$0xf]
        %v2084 = vld [vmem:[#allocation11 + $0x10c] sm:$0xf]
        %v2085 = vld [vmem:[#allocation11 + $0x110] sm:$0xf]
        %v2086 = vld [vmem:[#allocation11 + $0x114] sm:$0xf]
        %v2087 = vld [vmem:[#allocation11 + $0x118] sm:$0xf]
        %v2088 = vld [vmem:[#allocation11 + $0x11c] sm:$0xf]
        %v2089 = vld [vmem:[#allocation11 + $0x120] sm:$0xf]
        %v2090 = vld [vmem:[#allocation11 + $0x124] sm:$0xf]
        %v2091 = vld [vmem:[#allocation11 + $0x128] sm:$0xf]
        %v2092 = vld [vmem:[#allocation11 + $0x12c] sm:$0xf]
        %v2093 = vld [vmem:[#allocation11 + $0x130] sm:$0xf]
        %v2094 = vld [vmem:[#allocation11 + $0x134] sm:$0xf]
        %v2095 = vld [vmem:[#allocation11 + $0x138] sm:$0xf]
        %v2096 = vld [vmem:[#allocation11 + $0x13c] sm:$0xf]
        %v2097 = vld [vmem:[#allocation11 + $0x140] sm:$0xf]
        %v2098 = vld [vmem:[#allocation11 + $0x144] sm:$0xf]
        %v2099 = vld [vmem:[#allocation11 + $0x148] sm:$0xf]
        %v2100 = vld [vmem:[#allocation11 + $0x14c] sm:$0xf]
        %v2101 = vld [vmem:[#allocation11 + $0x150] sm:$0xf]
        %v2102 = vld [vmem:[#allocation11 + $0x154] sm:$0xf]
        %v2103 = vld [vmem:[#allocation11 + $0x158] sm:$0xf]
        %v2104 = vld [vmem:[#allocation11 + $0x15c] sm:$0xf]
        %v2105 = vld [vmem:[#allocation11 + $0x160] sm:$0xf]
        %v2106 = vld [vmem:[#allocation11 + $0x164] sm:$0xf]
        %v2107 = vld [vmem:[#allocation11 + $0x168] sm:$0xf]
        %v2108 = vld [vmem:[#allocation11 + $0x16c] sm:$0xf]
        %v2109 = vld [vmem:[#allocation11 + $0x170] sm:$0xf]
        %v2110 = vld [vmem:[#allocation11 + $0x174] sm:$0xf]
        %v2111 = vld [vmem:[#allocation11 + $0x178] sm:$0xf]
        %v2112 = vld [vmem:[#allocation11 + $0x17c] sm:$0xf]
        %v2113 = vld [vmem:[#allocation11 + $0x180] sm:$0xf]
        %v2114 = vld [vmem:[#allocation11 + $0x184] sm:$0xf]
        %v2115 = vld [vmem:[#allocation11 + $0x188] sm:$0xf]
        %v2116 = vld [vmem:[#allocation11 + $0x18c] sm:$0xf]
        %v2117 = vld [vmem:[#allocation11 + $0x190] sm:$0xf]
        %v2118 = vld [vmem:[#allocation11 + $0x194] sm:$0xf]
        %v2119 = vld [vmem:[#allocation11 + $0x198] sm:$0xf]
        %v2120 = vld [vmem:[#allocation11 + $0x19c] sm:$0xf]
        %v2121 = vld [vmem:[#allocation11 + $0x1a0] sm:$0xf]
        %v2122 = vld [vmem:[#allocation11 + $0x1a4] sm:$0xf]
        %v2123 = vld [vmem:[#allocation11 + $0x1a8] sm:$0xf]
        %v2124 = vld [vmem:[#allocation11 + $0x1ac] sm:$0xf]
        %v2125 = vld [vmem:[#allocation11 + $0x1b0] sm:$0xf]
        %v2126 = vld [vmem:[#allocation11 + $0x1b4] sm:$0xf]
        %v2127 = vld [vmem:[#allocation11 + $0x1b8] sm:$0xf]
        %v2128 = vld [vmem:[#allocation11 + $0x1bc] sm:$0xf]
        %v2129 = vld [vmem:[#allocation11 + $0x1c0] sm:$0xf]
        %v2130 = vld [vmem:[#allocation11 + $0x1c4] sm:$0xf]
        %v2131 = vld [vmem:[#allocation11 + $0x1c8] sm:$0xf]
        %v2132 = vld [vmem:[#allocation11 + $0x1cc] sm:$0xf]
        %v2133 = vld [vmem:[#allocation11 + $0x1d0] sm:$0xf]
        %v2134 = vld [vmem:[#allocation11 + $0x1d4] sm:$0xf]
        %v2135 = vld [vmem:[#allocation11 + $0x1d8] sm:$0xf]
        %v2136 = vld [vmem:[#allocation11 + $0x1dc] sm:$0xf]
        %v2137 = vld [vmem:[#allocation11 + $0x1e0] sm:$0xf]
        %v2138 = vld [vmem:[#allocation11 + $0x1e4] sm:$0xf]
        %v2139 = vld [vmem:[#allocation11 + $0x1e8] sm:$0xf]
        %v2140 = vld [vmem:[#allocation11 + $0x1ec] sm:$0xf]
        %v2141 = vld [vmem:[#allocation11 + $0x1f0] sm:$0xf]
        %v2142 = vld [vmem:[#allocation11 + $0x1f4] sm:$0xf]
        %v2143 = vld [vmem:[#allocation11 + $0x1f8] sm:$0xf]
        %v2144 = vld [vmem:[#allocation11 + $0x1fc] sm:$0xf]
        %v2145 = vld [vmem:[#allocation11 + $0x200] sm:$0xf]
        %v2146 = vld [vmem:[#allocation11 + $0x204] sm:$0xf]
        %v2147 = vld [vmem:[#allocation11 + $0x208] sm:$0xf]
        %v2148 = vld [vmem:[#allocation11 + $0x20c] sm:$0xf]
        %v2149 = vld [vmem:[#allocation11 + $0x210] sm:$0xf]
        %v2150 = vld [vmem:[#allocation11 + $0x214] sm:$0xf]
        %v2151 = vld [vmem:[#allocation11 + $0x218] sm:$0xf]
        %v2152 = vld [vmem:[#allocation11 + $0x21c] sm:$0xf]
        %v2153 = vld [vmem:[#allocation11 + $0x220] sm:$0xf]
        %v2154 = vld [vmem:[#allocation11 + $0x224] sm:$0xf]
        %v2155 = vld [vmem:[#allocation11 + $0x228] sm:$0xf]
        %v2156 = vld [vmem:[#allocation11 + $0x22c] sm:$0xf]
        %v2157 = vld [vmem:[#allocation11 + $0x230] sm:$0xf]
        %v2158 = vld [vmem:[#allocation11 + $0x234] sm:$0xf]
        %v2159 = vld [vmem:[#allocation11 + $0x238] sm:$0xf]
        %v2160 = vld [vmem:[#allocation11 + $0x23c] sm:$0xf]
        %v2161 = vpack.c.b16 %v1847, %v1845
        %v2162 = vpack.c.b16 %v1999, %v1993
        %v2163 = vpack.c.b16 %v2000, %v1994
        %v2164 = vpack.c.b16 %v1899, %v1897
        %v2165 = vpack.c.b16 %v2001, %v1995
        %v2166 = vpack.c.b16 %v2002, %v1996
        %v2167 = vpack.c.b16 %v1951, %v1949
        %v2168 = vpack.c.b16 %v2003, %v1997
        %v2169 = vpack.c.b16 %v2004, %v1998
        %v2170 = vpack.c.b16 %v1851, %v1849
        %v2171 = vpack.c.b16 %v2011, %v2005
        %v2172 = vpack.c.b16 %v2012, %v2006
        %v2173 = vpack.c.b16 %v1903, %v1901
        %v2174 = vpack.c.b16 %v2013, %v2007
        %v2175 = vpack.c.b16 %v2014, %v2008
        %v2176 = vpack.c.b16 %v1955, %v1953
        %v2177 = vpack.c.b16 %v2015, %v2009
        %v2178 = vpack.c.b16 %v2016, %v2010
        %v2341 = vunpack.c.l.b16 %v2017
        %v2342 = vunpack.c.l.b16 %v2018
        %v2343 = vunpack.c.l.b16 %v2019
        %v2344 = vunpack.c.l.b16 %v2020
        %v2345 = vunpack.c.l.b16 %v2021
        %v2346 = vunpack.c.l.b16 %v2022
        %v2347 = vunpack.c.l.b16 %v2023
        %v2348 = vunpack.c.l.b16 %v2024
        %v2349 = vunpack.c.l.b16 %v2025
        %v2350 = vunpack.c.l.b16 %v2026
        %v2351 = vunpack.c.l.b16 %v2027
        %v2352 = vunpack.c.l.b16 %v2028
        %v2353 = vunpack.c.l.b16 %v2029
        %v2354 = vunpack.c.l.b16 %v2030
        %v2355 = vunpack.c.l.b16 %v2031
        %v2356 = vunpack.c.l.b16 %v2032
        %v2357 = vunpack.c.l.b16 %v2033
        %v2358 = vunpack.c.l.b16 %v2034
        %v2359 = vunpack.c.l.b16 %v2035
        %v2360 = vunpack.c.l.b16 %v2036
        %v2361 = vunpack.c.l.b16 %v2037
        %v2362 = vunpack.c.l.b16 %v2038
        %v2363 = vunpack.c.l.b16 %v2039
        %v2364 = vunpack.c.l.b16 %v2040
        %v2365 = vunpack.c.l.b16 %v2041
        %v2366 = vunpack.c.l.b16 %v2042
        %v2367 = vunpack.c.l.b16 %v2043
        %v2368 = vunpack.c.l.b16 %v2044
        %v2369 = vunpack.c.l.b16 %v2045
        %v2370 = vunpack.c.l.b16 %v2046
        %v2371 = vunpack.c.l.b16 %v2047
        %v2372 = vunpack.c.l.b16 %v2048
        %v2373 = vunpack.c.l.b16 %v2049
        %v2374 = vunpack.c.l.b16 %v2050
        %v2375 = vunpack.c.l.b16 %v2051
        %v2376 = vunpack.c.l.b16 %v2052
        %v2377 = vunpack.c.l.b16 %v2053
        %v2378 = vunpack.c.l.b16 %v2054
        %v2379 = vunpack.c.l.b16 %v2055
        %v2380 = vunpack.c.l.b16 %v2056
        %v2381 = vunpack.c.l.b16 %v2057
        %v2382 = vunpack.c.l.b16 %v2058
        %v2383 = vunpack.c.l.b16 %v2059
        %v2384 = vunpack.c.l.b16 %v2060
        %v2385 = vunpack.c.l.b16 %v2061
        %v2386 = vunpack.c.l.b16 %v2062
        %v2387 = vunpack.c.l.b16 %v2063
        %v2388 = vunpack.c.l.b16 %v2064
        %v2389 = vunpack.c.l.b16 %v2065
        %v2390 = vunpack.c.l.b16 %v2066
        %v2391 = vunpack.c.l.b16 %v2067
        %v2392 = vunpack.c.l.b16 %v2068
        %v2393 = vunpack.c.l.b16 %v2069
        %v2394 = vunpack.c.l.b16 %v2070
        %v2395 = vunpack.c.l.b16 %v2071
        %v2396 = vunpack.c.l.b16 %v2072
        %v2397 = vunpack.c.l.b16 %v2073
        %v2398 = vunpack.c.l.b16 %v2074
        %v2399 = vunpack.c.l.b16 %v2075
        %v2400 = vunpack.c.l.b16 %v2076
        %v2401 = vunpack.c.l.b16 %v2077
        %v2402 = vunpack.c.l.b16 %v2078
        %v2403 = vunpack.c.l.b16 %v2079
        %v2404 = vunpack.c.l.b16 %v2080
        %v2405 = vunpack.c.l.b16 %v2081
        %v2406 = vunpack.c.l.b16 %v2082
        %v2407 = vunpack.c.l.b16 %v2083
        %v2408 = vunpack.c.l.b16 %v2084
        %v2409 = vunpack.c.l.b16 %v2085
        %v2410 = vunpack.c.l.b16 %v2086
        %v2411 = vunpack.c.l.b16 %v2087
        %v2412 = vunpack.c.l.b16 %v2088
        %v2413 = vunpack.c.l.b16 %v2089
        %v2414 = vunpack.c.l.b16 %v2090
        %v2415 = vunpack.c.l.b16 %v2091
        %v2416 = vunpack.c.l.b16 %v2092
        %v2417 = vunpack.c.l.b16 %v2093
        %v2418 = vunpack.c.l.b16 %v2094
        %v2419 = vunpack.c.l.b16 %v2095
        %v2420 = vunpack.c.l.b16 %v2096
        %v2421 = vunpack.c.l.b16 %v2097
        %v2422 = vunpack.c.l.b16 %v2098
        %v2423 = vunpack.c.l.b16 %v2099
        %v2424 = vunpack.c.l.b16 %v2100
        %v2425 = vunpack.c.l.b16 %v2101
        %v2426 = vunpack.c.l.b16 %v2102
        %v2427 = vunpack.c.l.b16 %v2103
        %v2428 = vunpack.c.l.b16 %v2104
        %v2429 = vunpack.c.l.b16 %v2105
        %v2430 = vunpack.c.l.b16 %v2106
        %v2431 = vunpack.c.l.b16 %v2107
        %v2432 = vunpack.c.l.b16 %v2108
        %v2433 = vunpack.c.l.b16 %v2109
        %v2434 = vunpack.c.l.b16 %v2110
        %v2435 = vunpack.c.l.b16 %v2111
        %v2436 = vunpack.c.l.b16 %v2112
        %v2437 = vunpack.c.l.b16 %v2113
        %v2438 = vunpack.c.l.b16 %v2114
        %v2439 = vunpack.c.l.b16 %v2115
        %v2440 = vunpack.c.l.b16 %v2116
        %v2441 = vunpack.c.l.b16 %v2117
        %v2442 = vunpack.c.l.b16 %v2118
        %v2443 = vunpack.c.l.b16 %v2119
        %v2444 = vunpack.c.l.b16 %v2120
        %v2445 = vunpack.c.l.b16 %v2121
        %v2446 = vunpack.c.l.b16 %v2122
        %v2447 = vunpack.c.l.b16 %v2123
        %v2448 = vunpack.c.l.b16 %v2124
        %v2449 = vunpack.c.l.b16 %v2125
        %v2450 = vunpack.c.l.b16 %v2126
        %v2451 = vunpack.c.l.b16 %v2127
        %v2452 = vunpack.c.l.b16 %v2128
        %v2453 = vunpack.c.l.b16 %v2129
        %v2454 = vunpack.c.l.b16 %v2130
        %v2455 = vunpack.c.l.b16 %v2131
        %v2456 = vunpack.c.l.b16 %v2132
        %v2457 = vunpack.c.l.b16 %v2133
        %v2458 = vunpack.c.l.b16 %v2134
        %v2459 = vunpack.c.l.b16 %v2135
        %v2460 = vunpack.c.l.b16 %v2136
        %v2461 = vunpack.c.l.b16 %v2137
        %v2462 = vunpack.c.l.b16 %v2138
        %v2463 = vunpack.c.l.b16 %v2139
        %v2464 = vunpack.c.l.b16 %v2140
        %v2465 = vunpack.c.l.b16 %v2141
        %v2466 = vunpack.c.l.b16 %v2142
        %v2467 = vunpack.c.l.b16 %v2143
        %v2468 = vunpack.c.l.b16 %v2144
        %v2469 = vunpack.c.l.b16 %v2145
        %v2470 = vunpack.c.l.b16 %v2146
        %v2471 = vunpack.c.l.b16 %v2147
        %v2472 = vunpack.c.l.b16 %v2148
        %v2473 = vunpack.c.l.b16 %v2149
        %v2474 = vunpack.c.l.b16 %v2150
        %v2475 = vunpack.c.l.b16 %v2151
        %v2476 = vunpack.c.l.b16 %v2152
        %v2477 = vunpack.c.l.b16 %v2153
        %v2478 = vunpack.c.l.b16 %v2154
        %v2479 = vunpack.c.l.b16 %v2155
        %v2480 = vunpack.c.l.b16 %v2156
        %v2481 = vunpack.c.l.b16 %v2157
        %v2482 = vunpack.c.l.b16 %v2158
        %v2483 = vunpack.c.l.b16 %v2159
        %v2484 = vunpack.c.l.b16 %v2160
        %v2485 = vpack.c.b16 %v2342, %v2341
        %v2486 = vpack.c.b16 %v2344, %v2343
        %v2487 = vpack.c.b16 %v2346, %v2345
        %v2488 = vpack.c.b16 %v2348, %v2347
        %v2489 = vpack.c.b16 %v2350, %v2349
        %v2490 = vpack.c.b16 %v2352, %v2351
        %v2491 = vpack.c.b16 %v2354, %v2353
        %v2492 = vpack.c.b16 %v2356, %v2355
        %v2493 = vpack.c.b16 %v2358, %v2357
        %v2494 = vpack.c.b16 %v2360, %v2359
        %v2495 = vpack.c.b16 %v2362, %v2361
        %v2496 = vpack.c.b16 %v2364, %v2363
        %v2497 = vpack.c.b16 %v2366, %v2365
        %v2498 = vpack.c.b16 %v2368, %v2367
        %v2499 = vpack.c.b16 %v2370, %v2369
        %v2500 = vpack.c.b16 %v2372, %v2371
        %v2501 = vpack.c.b16 %v2374, %v2373
        %v2502 = vpack.c.b16 %v2376, %v2375
        %v2503 = vpack.c.b16 %v2378, %v2377
        %v2504 = vpack.c.b16 %v2380, %v2379
        %v2505 = vpack.c.b16 %v2382, %v2381
        %v2506 = vpack.c.b16 %v2384, %v2383
        %v2507 = vpack.c.b16 %v2386, %v2385
        %v2508 = vpack.c.b16 %v2388, %v2387
        %v2509 = vpack.c.b16 %v2390, %v2389
        %v2510 = vpack.c.b16 %v2392, %v2391
        %v2511 = vpack.c.b16 %v2394, %v2393
        %v2512 = vpack.c.b16 %v2396, %v2395
        %v2513 = vpack.c.b16 %v2398, %v2397
        %v2514 = vpack.c.b16 %v2400, %v2399
        %v2515 = vpack.c.b16 %v2402, %v2401
        %v2516 = vpack.c.b16 %v2404, %v2403
        %v2517 = vpack.c.b16 %v2406, %v2405
        %v2518 = vpack.c.b16 %v2408, %v2407
        %v2519 = vpack.c.b16 %v2410, %v2409
        %v2520 = vpack.c.b16 %v2412, %v2411
        %v2521 = vpack.c.b16 %v2414, %v2413
        %v2522 = vpack.c.b16 %v2416, %v2415
        %v2523 = vpack.c.b16 %v2418, %v2417
        %v2524 = vpack.c.b16 %v2420, %v2419
        %v2525 = vpack.c.b16 %v2422, %v2421
        %v2526 = vpack.c.b16 %v2424, %v2423
        %v2527 = vpack.c.b16 %v2426, %v2425
        %v2528 = vpack.c.b16 %v2428, %v2427
        %v2529 = vpack.c.b16 %v2430, %v2429
        %v2530 = vpack.c.b16 %v2432, %v2431
        %v2531 = vpack.c.b16 %v2434, %v2433
        %v2532 = vpack.c.b16 %v2436, %v2435
        %v2533 = vpack.c.b16 %v2438, %v2437
        %v2534 = vpack.c.b16 %v2440, %v2439
        %v2535 = vpack.c.b16 %v2442, %v2441
        %v2536 = vpack.c.b16 %v2444, %v2443
        %v2537 = vpack.c.b16 %v2446, %v2445
        %v2538 = vpack.c.b16 %v2448, %v2447
        %v2539 = vpack.c.b16 %v2450, %v2449
        %v2540 = vpack.c.b16 %v2452, %v2451
        %v2541 = vpack.c.b16 %v2454, %v2453
        %v2542 = vpack.c.b16 %v2456, %v2455
        %v2543 = vpack.c.b16 %v2458, %v2457
        %v2544 = vpack.c.b16 %v2460, %v2459
        %v2545 = vpack.c.b16 %v2462, %v2461
        %v2546 = vpack.c.b16 %v2464, %v2463
        %v2547 = vpack.c.b16 %v2466, %v2465
        %v2548 = vpack.c.b16 %v2468, %v2467
        %v2549 = vpack.c.b16 %v2470, %v2469
        %v2550 = vpack.c.b16 %v2472, %v2471
        %v2551 = vpack.c.b16 %v2474, %v2473
        %v2552 = vpack.c.b16 %v2476, %v2475
        %v2553 = vpack.c.b16 %v2478, %v2477
        %v2554 = vpack.c.b16 %v2480, %v2479
        %v2555 = vpack.c.b16 %v2482, %v2481
        %v2556 = vpack.c.b16 %v2484, %v2483
        %2629 = vmatprep.subr.bf16.mxu0 0
        %2630 = vmatpush1.bf16.msra.mxu0 %v2485
        %2631 = vmatprep.subr.bf16.mxu0 0
        %2632 = vmatpush1.bf16.msra.mxu0 %v2486
        %2633 = vmatprep.subr.bf16.mxu0 0
        %2634 = vmatpush1.bf16.msra.mxu0 %v2487
        %2635 = vmatprep.subr.bf16.mxu0 0
        %2636 = vmatpush1.bf16.msra.mxu0 %v2488
        %2637 = vmatprep.subr.bf16.mxu0 0
        %2638 = vmatpush1.bf16.msra.mxu0 %v2489
        %2639 = vmatprep.subr.bf16.mxu0 0
        %2640 = vmatpush1.bf16.msra.mxu0 %v2490
        %2641 = vmatprep.subr.bf16.mxu0 0
        %2642 = vmatpush1.bf16.msra.mxu0 %v2491
        %2643 = vmatprep.subr.bf16.mxu0 0
        %2644 = vmatpush1.bf16.msra.mxu0 %v2492
        %2645 = vmatprep.subr.bf16.mxu0 0
        %2646 = vmatpush1.bf16.msra.mxu0 %v2493
        %2647 = vmatprep.subr.bf16.mxu0 0
        %2648 = vmatpush1.bf16.msra.mxu0 %v2494
        %2649 = vmatprep.subr.bf16.mxu0 0
        %2650 = vmatpush1.bf16.msra.mxu0 %v2495
        %2651 = vmatprep.subr.bf16.mxu0 0
        %2652 = vmatpush1.bf16.msra.mxu0 %v2496
        %2653 = vmatprep.subr.bf16.mxu0 0
        %2654 = vmatpush1.bf16.msra.mxu0 %v2497
        %2655 = vmatprep.subr.bf16.mxu0 0
        %2656 = vmatpush1.bf16.msra.mxu0 %v2498
        %2657 = vmatprep.subr.bf16.mxu0 0
        %2658 = vmatpush1.bf16.msra.mxu0 %v2499
        %2659 = vmatprep.subr.bf16.mxu0 0
        %2660 = vmatpush1.bf16.msra.mxu0 %v2500
        %2661 = vmatprep.mubr.bf16.mxu0 %v2162
        %2662 = vmatmul.mubr.bf16.gmra.mrb[0].mxu0 %v2161
        %v2663 = vpop.f32.mrb[0].mxu0
        %v2664 = vadd.f32 0.0, %v2663
        %v2665 = vpop.f32.mrb[0].mxu0
        %v2666 = vpop.f32.mrb[0].mxu0
        %v2667 = vadd.f32 0.0, %v2666
        %v2668 = vpop.f32.mrb[0].mxu0
        %2669 = vmatprep.mubr.bf16.mxu0 %v2171
        %2670 = vmatmul.mubr.bf16.gmra.mrb[0].mxu0 %v2170
        %v2671 = vpop.f32.mrb[0].mxu0
        %v2672 = vadd.f32 0.0, %v2671
        %v2673 = vpop.f32.mrb[0].mxu0
        %v2674 = vpop.f32.mrb[0].mxu0
        %v2675 = vadd.f32 0.0, %v2674
        %v2676 = vpop.f32.mrb[0].mxu0
        %2677 = vdwg.mxu0
        %2678 = vmatprep.subr.bf16.mxu0 0
        %2679 = vmatpush1.bf16.msra.mxu0 %v2501
        %2680 = vmatprep.subr.bf16.mxu0 0
        %2681 = vmatpush1.bf16.msra.mxu0 %v2502
        %2682 = vmatprep.subr.bf16.mxu0 0
        %2683 = vmatpush1.bf16.msra.mxu0 %v2503
        %2684 = vmatprep.subr.bf16.mxu0 0
        %2685 = vmatpush1.bf16.msra.mxu0 %v2504
        %2686 = vmatprep.subr.bf16.mxu0 0
        %2687 = vmatpush1.bf16.msra.mxu0 %v2505
        %2688 = vmatprep.subr.bf16.mxu0 0
        %2689 = vmatpush1.bf16.msra.mxu0 %v2506
        %2690 = vmatprep.subr.bf16.mxu0 0
        %2691 = vmatpush1.bf16.msra.mxu0 %v2507
        %2692 = vmatprep.subr.bf16.mxu0 0
        %2693 = vmatpush1.bf16.msra.mxu0 %v2508
        %2694 = vmatprep.subr.bf16.mxu0 0
        %2695 = vmatpush1.bf16.msra.mxu0 %v2509
        %2696 = vmatprep.subr.bf16.mxu0 0
        %2697 = vmatpush1.bf16.msra.mxu0 %v2510
        %2698 = vmatprep.subr.bf16.mxu0 0
        %2699 = vmatpush1.bf16.msra.mxu0 %v2511
        %2700 = vmatprep.subr.bf16.mxu0 0
        %2701 = vmatpush1.bf16.msra.mxu0 %v2512
        %2702 = vmatprep.subr.bf16.mxu0 0
        %2703 = vmatpush1.bf16.msra.mxu0 %v2513
        %2704 = vmatprep.subr.bf16.mxu0 0
        %2705 = vmatpush1.bf16.msra.mxu0 %v2514
        %2706 = vmatprep.subr.bf16.mxu0 0
        %2707 = vmatpush1.bf16.msra.mxu0 %v2515
        %2708 = vmatprep.subr.bf16.mxu0 0
        %2709 = vmatpush1.bf16.msra.mxu0 %v2516
        %2710 = vmatprep.mubr.bf16.mxu0 %v2164
        %2711 = vmatmul.mubr.bf16.gmra.mrb[0].mxu0 %v2163
        %v2712 = vpop.f32.mrb[0].mxu0
        %v2713 = vadd.f32 %v2664, %v2712
        %v2714 = vpop.f32.mrb[0].mxu0
        %v2715 = vpop.f32.mrb[0].mxu0
        %v2716 = vadd.f32 %v2667, %v2715
        %v2717 = vpop.f32.mrb[0].mxu0
        %2718 = vmatprep.mubr.bf16.mxu0 %v2173
        %2719 = vmatmul.mubr.bf16.gmra.mrb[0].mxu0 %v2172
        %v2720 = vpop.f32.mrb[0].mxu0
        %v2721 = vadd.f32 %v2672, %v2720
        %v2722 = vpop.f32.mrb[0].mxu0
        %v2723 = vpop.f32.mrb[0].mxu0
        %v2724 = vadd.f32 %v2675, %v2723
        %v2725 = vpop.f32.mrb[0].mxu0
        %2726 = vdwg.mxu0
        %2727 = vmatprep.subr.bf16.mxu0 0
        %2728 = vmatpush1.bf16.msra.mxu0 %v2517
        %2729 = vmatprep.subr.bf16.mxu0 0
        %2730 = vmatpush1.bf16.msra.mxu0 %v2518
        %2731 = vmatprep.subr.bf16.mxu0 0
        %2732 = vmatpush1.bf16.msra.mxu0 %v2519
        %2733 = vmatprep.subr.bf16.mxu0 0
        %2734 = vmatpush1.bf16.msra.mxu0 %v2520
        %2735 = vmatprep.subr.bf16.mxu0 0
        %2736 = vmatpush1.bf16.msra.mxu0 %v2521
        %2737 = vmatprep.subr.bf16.mxu0 0
        %2738 = vmatpush1.bf16.msra.mxu0 %v2522
        %2739 = vmatprep.subr.bf16.mxu0 0
        %2740 = vmatpush1.bf16.msra.mxu0 %v2523
        %2741 = vmatprep.subr.bf16.mxu0 0
        %2742 = vmatpush1.bf16.msra.mxu0 %v2524
        %2743 = vmatprep.subr.bf16.mxu0 0
        %2744 = vmatpush1.bf16.msra.mxu0 %v2525
        %2745 = vmatprep.subr.bf16.mxu0 0
        %2746 = vmatpush1.bf16.msra.mxu0 %v2526
        %2747 = vmatprep.subr.bf16.mxu0 0
        %2748 = vmatpush1.bf16.msra.mxu0 %v2527
        %2749 = vmatprep.subr.bf16.mxu0 0
        %2750 = vmatpush1.bf16.msra.mxu0 %v2528
        %2751 = vmatprep.subr.bf16.mxu0 0
        %2752 = vmatpush1.bf16.msra.mxu0 %v2529
        %2753 = vmatprep.subr.bf16.mxu0 0
        %2754 = vmatpush1.bf16.msra.mxu0 %v2530
        %2755 = vmatprep.subr.bf16.mxu0 0
        %2756 = vmatpush1.bf16.msra.mxu0 %v2531
        %2757 = vmatprep.subr.bf16.mxu0 0
        %2758 = vmatpush1.bf16.msra.mxu0 %v2532
        %2759 = vmatprep.mubr.bf16.mxu0 %v2166
        %2760 = vmatmul.mubr.bf16.gmra.mrb[0].mxu0 %v2165
        %v2761 = vpop.f32.mrb[0].mxu0
        %v2762 = vadd.f32 %v2713, %v2761
        %v2763 = vpop.f32.mrb[0].mxu0
        %v2764 = vpop.f32.mrb[0].mxu0
        %v2765 = vadd.f32 %v2716, %v2764
        %v2766 = vpop.f32.mrb[0].mxu0
        %2767 = vmatprep.mubr.bf16.mxu0 %v2175
        %2768 = vmatmul.mubr.bf16.gmra.mrb[0].mxu0 %v2174
        %v2769 = vpop.f32.mrb[0].mxu0
        %v2770 = vadd.f32 %v2721, %v2769
        %v2771 = vpop.f32.mrb[0].mxu0
        %v2772 = vpop.f32.mrb[0].mxu0
        %v2773 = vadd.f32 %v2724, %v2772
        %v2774 = vpop.f32.mrb[0].mxu0
        %2775 = vdwg.mxu0
        %2776 = vmatprep.subr.bf16.mxu0 0
        %2777 = vmatpush1.bf16.msra.mxu0 %v2533
        %2778 = vmatprep.subr.bf16.mxu0 0
        %2779 = vmatpush1.bf16.msra.mxu0 %v2534
        %2780 = vmatprep.subr.bf16.mxu0 0
        %2781 = vmatpush1.bf16.msra.mxu0 %v2535
        %2782 = vmatprep.subr.bf16.mxu0 0
        %2783 = vmatpush1.bf16.msra.mxu0 %v2536
        %2784 = vmatprep.subr.bf16.mxu0 0
        %2785 = vmatpush1.bf16.msra.mxu0 %v2537
        %2786 = vmatprep.subr.bf16.mxu0 0
        %2787 = vmatpush1.bf16.msra.mxu0 %v2538
        %2788 = vmatprep.subr.bf16.mxu0 0
        %2789 = vmatpush1.bf16.msra.mxu0 %v2539
        %2790 = vmatprep.subr.bf16.mxu0 0
        %2791 = vmatpush1.bf16.msra.mxu0 %v2540
        %2792 = vmatprep.subr.bf16.mxu0 0
        %2793 = vmatpush1.bf16.msra.mxu0 %v2541
        %2794 = vmatprep.subr.bf16.mxu0 0
        %2795 = vmatpush1.bf16.msra.mxu0 %v2542
        %2796 = vmatprep.subr.bf16.mxu0 0
        %2797 = vmatpush1.bf16.msra.mxu0 %v2543
        %2798 = vmatprep.subr.bf16.mxu0 0
        %2799 = vmatpush1.bf16.msra.mxu0 %v2544
        %2800 = vmatprep.subr.bf16.mxu0 0
        %2801 = vmatpush1.bf16.msra.mxu0 %v2545
        %2802 = vmatprep.subr.bf16.mxu0 0
        %2803 = vmatpush1.bf16.msra.mxu0 %v2546
        %2804 = vmatprep.subr.bf16.mxu0 0
        %2805 = vmatpush1.bf16.msra.mxu0 %v2547
        %2806 = vmatprep.subr.bf16.mxu0 0
        %2807 = vmatpush1.bf16.msra.mxu0 %v2548
        %2808 = vmatprep.mubr.bf16.mxu0 %v2168
        %2809 = vmatmul.mubr.bf16.gmra.mrb[0].mxu0 %v2167
        %v2810 = vpop.f32.mrb[0].mxu0
        %v2811 = vadd.f32 %v2762, %v2810
        %v2812 = vpop.f32.mrb[0].mxu0
        %v2813 = vpop.f32.mrb[0].mxu0
        %v2814 = vadd.f32 %v2765, %v2813
        %v2815 = vpop.f32.mrb[0].mxu0
        %2816 = vmatprep.mubr.bf16.mxu0 %v2177
        %2817 = vmatmul.mubr.bf16.gmra.mrb[0].mxu0 %v2176
        %v2818 = vpop.f32.mrb[0].mxu0
        %v2819 = vadd.f32 %v2770, %v2818
        %v2820 = vpop.f32.mrb[0].mxu0
        %v2821 = vpop.f32.mrb[0].mxu0
        %v2822 = vadd.f32 %v2773, %v2821
        %v2823 = vpop.f32.mrb[0].mxu0
        %2824 = vdwg.mxu0
        %2825 = vmatprep.subr.bf16.mxu0 0
        %2826 = vmatpush1.bf16.msra.mxu0 %v2549
        %2827 = vmatprep.subr.bf16.mxu0 0
        %2828 = vmatpush1.bf16.msra.mxu0 %v2550
        %2829 = vmatprep.subr.bf16.mxu0 0
        %2830 = vmatpush1.bf16.msra.mxu0 %v2551
        %2831 = vmatprep.subr.bf16.mxu0 0
        %2832 = vmatpush1.bf16.msra.mxu0 %v2552
        %2833 = vmatprep.subr.bf16.mxu0 0
        %2834 = vmatpush1.bf16.msra.mxu0 %v2553
        %2835 = vmatprep.subr.bf16.mxu0 0
        %2836 = vmatpush1.bf16.msra.mxu0 %v2554
        %2837 = vmatprep.subr.bf16.mxu0 0
        %2838 = vmatpush1.bf16.msra.mxu0 %v2555
        %2839 = vmatprep.subr.bf16.mxu0 0
        %2840 = vmatpush1.bf16.msra.mxu0 %v2556
        %2841 = vmatprep.subr.bf16.mxu0 0
        %2842 = vmatpush1.bf16.msra.mxu0 0
        %2843 = vmatprep.subr.bf16.mxu0 0
        %2844 = vmatpush1.bf16.msra.mxu0 0
        %2845 = vmatprep.subr.bf16.mxu0 0
        %2846 = vmatpush1.bf16.msra.mxu0 0
        %2847 = vmatprep.subr.bf16.mxu0 0
        %2848 = vmatpush1.bf16.msra.mxu0 0
        %2849 = vmatprep.subr.bf16.mxu0 0
        %2850 = vmatpush1.bf16.msra.mxu0 0
        %2851 = vmatprep.subr.bf16.mxu0 0
        %2852 = vmatpush1.bf16.msra.mxu0 0
        %2853 = vmatprep.subr.bf16.mxu0 0
        %2854 = vmatpush1.bf16.msra.mxu0 0
        %2855 = vmatprep.subr.bf16.mxu0 0
        %2856 = vmatpush1.bf16.msra.mxu0 0
        %2857 = vmatprep.mubr.bf16.mxu0 0
        %2858 = vmatmul.mubr.bf16.gmra.mrb[0].mxu0 %v2169
        %v2859 = vpop.f32.mrb[0].mxu0
        %v2860 = vadd.f32 %v2811, %v2859
        %v2861 = vpop.f32.mrb[0].mxu0
        %v2862 = vpop.f32.mrb[0].mxu0
        %v2863 = vadd.f32 %v2814, %v2862
        %v2864 = vpop.f32.mrb[0].mxu0
        %2865 = vmatprep.mubr.bf16.mxu0 0
        %2866 = vmatmul.mubr.bf16.gmra.mrb[0].mxu0 %v2178
        %v2867 = vpop.f32.mrb[0].mxu0
        %v2868 = vadd.f32 %v2819, %v2867
        %v2869 = vpop.f32.mrb[0].mxu0
        %v2870 = vpop.f32.mrb[0].mxu0
        %v2871 = vadd.f32 %v2822, %v2870
        %v2872 = vpop.f32.mrb[0].mxu0
        %2873 = vdwg.mxu0
        %v2874 = vld [vmem:[#allocation12] sm:$0x1]
        %v2876 = vlaneseq
        %v2877 = vshrl.u32 %v2876, 7
        %v2878 = vsub.s32 0, %v2877
        %v2879 = vrot.slane %v2874, %v2878
        %v2881 = vmul.f32 %v2860, %v2879
        %v2882 = vmul.f32 %v2863, %v2879
        %v2883 = vmul.f32 %v2868, %v2879
        %v2884 = vmul.f32 %v2871, %v2879
        %v2885 = vld [vmem:[#allocation14] sm:$0x1]
        %v2887 = vlaneseq
        %v2888 = vshrl.u32 %v2887, 7
        %v2889 = vsub.s32 0, %v2888
        %v2890 = vrot.slane %v2885, %v2889
        %v2892 = vadd.f32 %v2881, %v2890
        %v2893 = vadd.f32 %v2882, %v2890
        %v2894 = vadd.f32 %v2883, %v2890
        %v2895 = vadd.f32 %v2884, %v2890
        %v2896 = vrot.slane %v523, 4
        %v2897 = vrot.slane %v527, 4
        %v2898 = vrot.slane %v531, 4
        %v2899 = vrot.slane %v535, 4
        %v2900 = vld [vmem:[#allocation15] sm:$0xf]
        %v2901 = vld [vmem:[#allocation15 + $0x4] sm:$0xf]
        %v2902 = vld [vmem:[#allocation15 + $0x8] sm:$0xf]
        %v2903 = vld [vmem:[#allocation15 + $0xc] sm:$0xf]
        %v2904 = vld [vmem:[#allocation15 + $0x10] sm:$0xf]
        %v2905 = vld [vmem:[#allocation15 + $0x14] sm:$0xf]
        %v2906 = vld [vmem:[#allocation15 + $0x18] sm:$0xf]
        %v2907 = vld [vmem:[#allocation15 + $0x1c] sm:$0xf]
        %v2908 = vld [vmem:[#allocation15 + $0x20] sm:$0xf]
        %v2909 = vld [vmem:[#allocation15 + $0x24] sm:$0xf]
        %v2910 = vld [vmem:[#allocation15 + $0x28] sm:$0xf]
        %v2911 = vld [vmem:[#allocation15 + $0x2c] sm:$0xf]
        %v2912 = vld [vmem:[#allocation15 + $0x30] sm:$0xf]
        %v2913 = vld [vmem:[#allocation15 + $0x34] sm:$0xf]
        %v2914 = vld [vmem:[#allocation15 + $0x38] sm:$0xf]
        %v2915 = vld [vmem:[#allocation15 + $0x3c] sm:$0xf]
        %v2916 = vunpack.c.l.b16 %v2896
        %v2917 = vunpack.c.l.b16 %v2897
        %v2918 = vunpack.c.l.b16 %v2898
        %v2919 = vunpack.c.l.b16 %v2899
        %v2920 = vpack.c.b16 %v2917, %v2916
        %v2921 = vpack.c.b16 %v2919, %v2918
        %v2940 = vunpack.c.l.b16 %v2900
        %v2941 = vunpack.c.l.b16 %v2901
        %v2942 = vunpack.c.l.b16 %v2902
        %v2943 = vunpack.c.l.b16 %v2903
        %v2944 = vunpack.c.l.b16 %v2904
        %v2945 = vunpack.c.l.b16 %v2905
        %v2946 = vunpack.c.l.b16 %v2906
        %v2947 = vunpack.c.l.b16 %v2907
        %v2948 = vunpack.c.l.b16 %v2908
        %v2949 = vunpack.c.l.b16 %v2909
        %v2950 = vunpack.c.l.b16 %v2910
        %v2951 = vunpack.c.l.b16 %v2911
        %v2952 = vunpack.c.l.b16 %v2912
        %v2953 = vunpack.c.l.b16 %v2913
        %v2954 = vunpack.c.l.b16 %v2914
        %v2955 = vunpack.c.l.b16 %v2915
        %v2956 = vpack.c.b16 %v2941, %v2940
        %v2957 = vpack.c.b16 %v2943, %v2942
        %v2958 = vpack.c.b16 %v2945, %v2944
        %v2959 = vpack.c.b16 %v2947, %v2946
        %v2960 = vpack.c.b16 %v2949, %v2948
        %v2961 = vpack.c.b16 %v2951, %v2950
        %v2962 = vpack.c.b16 %v2953, %v2952
        %v2963 = vpack.c.b16 %v2955, %v2954
        %2972 = vmatprep.subr.bf16.mxu0 0
        %2973 = vmatpush1.bf16.msra.mxu0 %v2956
        %2974 = vmatprep.subr.bf16.mxu0 0
        %2975 = vmatpush1.bf16.msra.mxu0 %v2957
        %2976 = vmatprep.subr.bf16.mxu0 0
        %2977 = vmatpush1.bf16.msra.mxu0 %v2958
        %2978 = vmatprep.subr.bf16.mxu0 0
        %2979 = vmatpush1.bf16.msra.mxu0 %v2959
        %2980 = vmatprep.subr.bf16.mxu0 0
        %2981 = vmatpush1.bf16.msra.mxu0 %v2960
        %2982 = vmatprep.subr.bf16.mxu0 0
        %2983 = vmatpush1.bf16.msra.mxu0 %v2961
        %2984 = vmatprep.subr.bf16.mxu0 0
        %2985 = vmatpush1.bf16.msra.mxu0 %v2962
        %2986 = vmatprep.subr.bf16.mxu0 0
        %2987 = vmatpush1.bf16.msra.mxu0 %v2963
        %2988 = vmatprep.subr.bf16.mxu0 0
        %2989 = vmatpush1.bf16.msra.mxu0 0
        %2990 = vmatprep.subr.bf16.mxu0 0
        %2991 = vmatpush1.bf16.msra.mxu0 0
        %2992 = vmatprep.subr.bf16.mxu0 0
        %2993 = vmatpush1.bf16.msra.mxu0 0
        %2994 = vmatprep.subr.bf16.mxu0 0
        %2995 = vmatpush1.bf16.msra.mxu0 0
        %2996 = vmatprep.subr.bf16.mxu0 0
        %2997 = vmatpush1.bf16.msra.mxu0 0
        %2998 = vmatprep.subr.bf16.mxu0 0
        %2999 = vmatpush1.bf16.msra.mxu0 0
        %3000 = vmatprep.subr.bf16.mxu0 0
        %3001 = vmatpush1.bf16.msra.mxu0 0
        %3002 = vmatprep.subr.bf16.mxu0 0
        %3003 = vmatpush1.bf16.msra.mxu0 0
        %3004 = vmatprep.mubr.bf16.mxu0 0
        %3005 = vmatmul.mubr.bf16.gmra.mrb[0].mxu0 %v2920
        %v3006 = vpop.f32.mrb[0].mxu0
        %v3007 = vadd.f32 0.0, %v3006
        %v3008 = vpop.f32.mrb[0].mxu0
        %v3009 = vpop.f32.mrb[0].mxu0
        %v3010 = vadd.f32 0.0, %v3009
        %v3011 = vpop.f32.mrb[0].mxu0
        %3012 = vmatprep.mubr.bf16.mxu0 0
        %3013 = vmatmul.mubr.bf16.gmra.mrb[0].mxu0 %v2921
        %v3014 = vpop.f32.mrb[0].mxu0
        %v3015 = vadd.f32 0.0, %v3014
        %v3016 = vpop.f32.mrb[0].mxu0
        %v3017 = vpop.f32.mrb[0].mxu0
        %v3018 = vadd.f32 0.0, %v3017
        %v3019 = vpop.f32.mrb[0].mxu0
        %3020 = vdwg.mxu0
        %v3021 = vld [vmem:[#allocation17] sm:$0x1]
        %v3023 = vlaneseq
        %v3024 = vshrl.u32 %v3023, 7
        %v3025 = vsub.s32 0, %v3024
        %v3026 = vrot.slane %v3021, %v3025
        %v3028 = vmul.f32 %v3007, %v3026
        %v3029 = vmul.f32 %v3010, %v3026
        %v3030 = vmul.f32 %v3015, %v3026
        %v3031 = vmul.f32 %v3018, %v3026
        %v3032 = vld [vmem:[#allocation18] sm:$0x1]
        %v3034 = vlaneseq
        %v3035 = vshrl.u32 %v3034, 7
        %v3036 = vsub.s32 0, %v3035
        %v3037 = vrot.slane %v3032, %v3036
        %v3039 = vadd.f32 %v3028, %v3037
        %v3040 = vadd.f32 %v3029, %v3037
        %v3041 = vadd.f32 %v3030, %v3037
        %v3042 = vadd.f32 %v3031, %v3037
        %v3043 = vadd.f32 %v2892, %v3039
        %v3044 = vadd.f32 %v2893, %v3040
        %v3045 = vadd.f32 %v2894, %v3041
        %v3046 = vadd.f32 %v2895, %v3042
        %v3047 = vmax.f32 %v3043, 0.0
        %v3048 = vmax.f32 %v3044, 0.0
        %v3049 = vmax.f32 %v3045, 0.0
        %v3050 = vmax.f32 %v3046, 0.0
        %v3051 = vpack.c.bf16 %v3047, %v3047
        %v3052 = vpack.c.bf16 %v3048, %v3048
        %v3053 = vpack.c.bf16 %v3049, %v3049
        %v3054 = vpack.c.bf16 %v3050, %v3050
        %3055 = vst [vmem:[%s510] sm:$0xf] %v3051
        %3056 = vst [vmem:[%s510 + $0x4] sm:$0xf] %v3052
        %3057 = vst [vmem:[%s510 + $0x8] sm:$0xf] %v3053
        %3058 = vst [vmem:[%s510 + $0xc] sm:$0xf] %v3054
        %s3059 = sand.u32 %s269, 1
        %s3060 = scalar_lea.sflag [#allocation5], %s3059
        %s3061 = sand.u32 %s269, 1
        %s3062 = smul.addr %s3061, 16
        %s3063 = scalar_lea.vmem [#allocation20], %s3062
        // Predicated region
        $region109: #{tpu_custom_call.1} parent=59 // pred_check
          %p3064 = pneg %p279
        $region110: #{tpu_custom_call.1} parent=59 // pred_check_branch
          %3066 = sbr.rel (%p3064) target = $region112
        $region111: #{tpu_custom_call.1} parent=59 // pred_region
          %s3067 = smul.u32 4, %s37
          %s3069 = ssub.s32 256, 256
          %3070 = vsyncadd %s3060, %s3069
          %s3071 = smul.addr %s36, 8
          %s3072 = sadd.s32 %s3067, %s3071
          %s3073 = smul.addr %s3072, 64
          %s3074 = scalar_lea.hbm %s10, %s3073
          %s3075 = sshll.u32 %s3063, 4
          %s3076 = int_to_ptr.vmem [resolvable:$true] %s3075
          %3081 = dma.vmem_to_hbm [thread:$0]  %s3076, 256, %s3074, %s3060, 64, 64, 4
        $region112: #{tpu_custom_call.1} parent=59 // pred_fallthru
          _
      $region60: #{tpu_custom_call.1} parent=5 // pred_fallthru
        _
      %p3082 = scmp.le.s32.totalorder 2, %s27
      // Predicated region
      $region113: #{tpu_custom_call.1} parent=5 // pred_check
        %p3083 = pneg %p3082
      $region114: #{tpu_custom_call.1} parent=5 // pred_check_branch
        %3085 = sbr.rel (%p3083) target = $region116
      $region115: #{tpu_custom_call.1} parent=5 // pred_region
        %s3086 = ssub.s32 %s27, 2
        // Predicated region
        $region117: #{tpu_custom_call.1} parent=115 // pred_check
          %p3087 = pneg %p285
        $region118: #{tpu_custom_call.1} parent=115 // pred_check_branch
          %3089 = sbr.rel (%p3087) target = $region120
        $region119: #{tpu_custom_call.1} parent=115 // pred_region
          %s3090 = sand.u32 %s270, 1
          %s3091 = scalar_lea.sflag [#allocation5], %s3090
          %s3092 = sand.u32 %s270, 1
          %s3093 = smul.addr %s3092, 16
          %s3094 = scalar_lea.vmem [#allocation20], %s3093
          %3095 = dma.done %s3091, 256
        $region120: #{tpu_custom_call.1} parent=115 // pred_fallthru
          _
      $region116: #{tpu_custom_call.1} parent=5 // pred_fallthru
        _
    $region6: #{tpu_custom_call.1} parent=1 // loop_footer
      %s31 = sadd.s32 1, %s27
    $region7: #{tpu_custom_call.1} parent=1 // loop_footer_branch
      %26 = sbr.rel target = $region3
    $region8: #{tpu_custom_call.1} parent=1 // loop_exit
      _
    %3096 = vsyncpa [#allocation4], 1
    %s3097 = scalar_lea.sflag [#allocation4], 1
    %3098 = vsyncpa %s3097, 1
    %3099 = vsyncpa [#allocation7], 1
    %3100 = vsyncpa [#allocation10], 1
    %3101 = vsyncpa [#allocation13], 1
    %3102 = vsyncpa [#allocation16], 1
    %3103 = vsyncpa [#allocation19], 1
    %3104 = vsyncpa [#allocation5], 1
    %s3105 = scalar_lea.sflag [#allocation5], 1
    %3106 = vsyncpa %s3105, 1

</llo_original>
